<compile_context>
chip_gen: v5e
topology: v5e:2x2
jax: 0.10.0
libtpu: 0.0.40
codegen_flags: <defaults>
</compile_context>

<pallas_src>
import math
from functools import partial

import jax
import jax.numpy as jnp
from jax.experimental import pallas as pl
from jax.experimental.pallas import tpu as pltpu


def _mha_kernel(q_ref, k_ref, v_ref,
                wq_ref, bq_ref, wk_ref, bk_ref, wv_ref, bv_ref,
                wo_ref, bo_ref,
                o_ref, acc_ref, *, scale):
    """One grid step = (bb batch elements) x (one head). Heads accumulate into acc_ref."""
    h = pl.program_id(1)
    f32 = jnp.float32

    @pl.when(h == 0)
    def _init():
        acc_ref[...] = jnp.zeros_like(acc_ref)

    bb, sq, d = q_ref.shape
    skv = k_ref.shape[1]
    hd = wq_ref.shape[1]
    in_dt = q_ref.dtype

    # Fold the batch block into the MXU row axis for the projections (M = bb*S rows).
    q2 = q_ref[...].reshape(bb * sq, d)
    k2 = k_ref[...].reshape(bb * skv, d)
    v2 = v_ref[...].reshape(bb * skv, d)

    # Per-head projections: native-dtype MXU operands, f32 accumulation.
    # 1/sqrt(head_dim) is folded into Q once (cheaper than scaling the (S,S) scores).
    qh = (jnp.dot(q2, wq_ref[...], preferred_element_type=f32)
          + bq_ref[...].astype(f32)) * scale
    kh = jnp.dot(k2, wk_ref[...], preferred_element_type=f32) + bk_ref[...].astype(f32)
    vh = jnp.dot(v2, wv_ref[...], preferred_element_type=f32) + bv_ref[...].astype(f32)

    qh = qh.astype(in_dt).reshape(bb, sq, hd)
    kh = kh.astype(in_dt).reshape(bb, skv, hd)
    vh = vh.astype(in_dt).reshape(bb, skv, hd)

    # scores_h = Qh @ Kh^T (scale already folded into Qh); softmax math in f32.
    s = jnp.einsum("bqd,bkd->bqk", qh, kh, preferred_element_type=f32)   # (bb, Sq, Skv)
    m = jnp.max(s, axis=-1, keepdims=True)
    p = jnp.exp(s - m)
    attn = p / jnp.sum(p, axis=-1, keepdims=True)   # exact softmax (approx recip failed tol)
    # TODO(synk): attention dropout for p > 0 in training mode is identity here (eval mode).

    ctx = jnp.einsum("bqk,bkd->bqd", attn.astype(in_dt), vh,
                     preferred_element_type=f32)                          # (bb, Sq, hd)

    # Per-head output projection accumulated in f32 scratch: out += ctx_h @ Wo[h*hd:(h+1)*hd].
    ctx2 = ctx.astype(wo_ref.dtype).reshape(bb * sq, hd)
    acc_ref[...] += jnp.dot(ctx2, wo_ref[...],
                            preferred_element_type=f32).reshape(bb, sq, d)

    @pl.when(h == pl.num_programs(1) - 1)
    def _finalize():
        o_ref[...] = (acc_ref[...] + bo_ref[...].astype(f32)).astype(o_ref.dtype)


def _default_vmem_limit():
    """Per-generation scoped-VMEM budget with headroom (v7x has only 64 MiB physical)."""
    try:
        cap = pltpu.get_tpu_info().vmem_capacity_bytes
    except Exception:
        cap = 64 * 1024 * 1024
    return int(min(cap - 8 * 1024 * 1024, 100 * 1024 * 1024))


def multi_headed_attention(query, key, value, params, num_heads,
                           dropout_probability=0.0,
                           *, batch_block=None, vmem_limit_bytes=None):
    """query: (B, Sq, D); key/value: (B, Skv, D). params: (D, D) weights / (D,) biases
    stored as y = x @ W + b. dropout_probability kept for signature parity (eval mode)."""
    del dropout_probability  # eval-mode forward: dropout is the identity
    B, Sq, D = query.shape
    Bk, Skv, Dk = key.shape
    assert value.shape == (Bk, Skv, Dk) and Bk == B and Dk == D, "key/value shape mismatch"
    assert D % num_heads == 0, "Model dimension must be divisible by the number of heads."
    hd = D // num_heads
    scale = 1.0 / math.sqrt(hd)

    # Fold several batch elements per grid step so the projection matmuls see ~256 MXU rows,
    # while keeping >= 2 parallel batch steps for v7x megacore when possible.
    if batch_block is None:
        batch_block = max(1, min(B, 256 // max(Sq, 1)))
        if B >= 2:
            batch_block = max(1, min(batch_block, B // 2))
    while B % batch_block != 0:
        batch_block -= 1
    bb = batch_block

    if vmem_limit_bytes is None:
        vmem_limit_bytes = _default_vmem_limit()

    wq, bq = params["wq"], params["bq"].reshape(1, D)
    wk, bk = params["wk"], params["bk"].reshape(1, D)
    wv, bv = params["wv"], params["bv"].reshape(1, D)
    wo, bo = params["wo"], params["bo"].reshape(1, D)

    q_spec = pl.BlockSpec((bb, Sq, D), lambda b, h: (b, 0, 0))
    kv_spec = pl.BlockSpec((bb, Skv, D), lambda b, h: (b, 0, 0))
    wqkv_spec = pl.BlockSpec((D, hd), lambda b, h: (0, h))   # per-head column slice
    bqkv_spec = pl.BlockSpec((1, hd), lambda b, h: (0, h))
    wo_spec = pl.BlockSpec((hd, D), lambda b, h: (h, 0))     # per-head row slice
    bo_spec = pl.BlockSpec((1, D), lambda b, h: (0, 0))
    out_spec = pl.BlockSpec((bb, Sq, D), lambda b, h: (b, 0, 0))

    kernel = partial(_mha_kernel, scale=scale)

    return pl.pallas_call(
        kernel,
        out_shape=jax.ShapeDtypeStruct((B, Sq, D), query.dtype),
        grid_spec=pltpu.PrefetchScalarGridSpec(
            num_scalar_prefetch=0,
            grid=(B // bb, num_heads),                       # reduction (heads) axis last
            in_specs=[q_spec, kv_spec, kv_spec,
                      wqkv_spec, bqkv_spec, wqkv_spec, bqkv_spec,
                      wqkv_spec, bqkv_spec, wo_spec, bo_spec],
            out_specs=out_spec,
            scratch_shapes=[pltpu.VMEM((bb, Sq, D), jnp.float32)],   # out-proj accumulator
        ),
        compiler_params=pltpu.CompilerParams(
            dimension_semantics=("parallel", "arbitrary"),
            vmem_limit_bytes=vmem_limit_bytes,
        ),
    )(query, key, value, wq, bq, wk, bk, wv, bv, wo, bo)


def _reference(query, key, value, params, num_heads):
    """Pure-jnp replica of the PyTorch MultiHeadedAttention.forward (eval mode)."""
    B, Sq, D = query.shape
    Skv = key.shape[1]
    hd = D // num_heads

    def split_heads(x, s):
        return x.reshape(B, s, num_heads, hd).transpose(0, 2, 1, 3)  # (B, H, S, hd)

    q = split_heads(query @ params["wq"] + params["bq"], Sq)
    k = split_heads(key @ params["wk"] + params["bk"], Skv)
    v = split_heads(value @ params["wv"] + params["bv"], Skv)

    scores = jnp.einsum("bhqd,bhkd->bhqk", q, k) / math.sqrt(hd)
    attn = jax.nn.softmax(scores, axis=-1)
    ctx = jnp.einsum("bhqk,bhkd->bhqd", attn, v)
    ctx = ctx.transpose(0, 2, 1, 3).reshape(B, Sq, D)
    return ctx @ params["wo"] + params["bo"]


if __name__ == "__main__":
    # Cross-attention shapes: query length != key/value length; head_dim = 128 (lane-dense).
    B, Sq, Skv, D, H = 4, 16, 32, 256, 2

    root = jax.random.PRNGKey(0)
    keys = jax.random.split(root, 11)
    wscale = 1.0 / math.sqrt(D)
    params = {
        "wq": jax.random.normal(keys[0], (D, D), jnp.float32) * wscale,
        "bq": jax.random.normal(keys[1], (D,), jnp.float32) * wscale,
        "wk": jax.random.normal(keys[2], (D, D), jnp.float32) * wscale,
        "bk": jax.random.normal(keys[3], (D,), jnp.float32) * wscale,
        "wv": jax.random.normal(keys[4], (D, D), jnp.float32) * wscale,
        "bv": jax.random.normal(keys[5], (D,), jnp.float32) * wscale,
        "wo": jax.random.normal(keys[6], (D, D), jnp.float32) * wscale,
        "bo": jax.random.normal(keys[7], (D,), jnp.float32) * wscale,
    }
    query = jax.random.normal(keys[8], (B, Sq, D), jnp.float32)
    key_in = jax.random.normal(keys[9], (B, Skv, D), jnp.float32)
    value = jax.random.normal(keys[10], (B, Skv, D), jnp.float32)

    out = multi_headed_attention(query, key_in, value, params, num_heads=H,
                                 dropout_probability=0.0)
    out = jax.block_until_ready(out)

    ref = _reference(query, key_in, value, params, num_heads=H)
    assert out.shape == ref.shape and out.dtype == query.dtype
    max_err = jnp.max(jnp.abs(out - ref))
    # Softmax division is exact now; remaining tolerance accounts for TPU default-precision
    # (bf16-operand) MXU matmuls on both the kernel and the jnp reference.
    assert jnp.allclose(out, ref, atol=1e-2, rtol=1e-2), f"mismatch vs reference: {max_err}"

    print("KERNEL_OK")
</pallas_src>

<mosaic_0001>
module attributes {stable_mosaic.version = 11 : i64} {
  func.func @_mha_kernel(%arg0: i32, %arg1: i32, %arg2: memref<2x16x256xf32, #tpu.memory_space<vmem>>, %arg3: memref<2x32x256xf32, #tpu.memory_space<vmem>>, %arg4: memref<2x32x256xf32, #tpu.memory_space<vmem>>, %arg5: memref<256x128xf32, #tpu.memory_space<vmem>>, %arg6: memref<1x128xf32, #tpu.memory_space<vmem>>, %arg7: memref<256x128xf32, #tpu.memory_space<vmem>>, %arg8: memref<1x128xf32, #tpu.memory_space<vmem>>, %arg9: memref<256x128xf32, #tpu.memory_space<vmem>>, %arg10: memref<1x128xf32, #tpu.memory_space<vmem>>, %arg11: memref<128x256xf32, #tpu.memory_space<vmem>>, %arg12: memref<1x256xf32, #tpu.memory_space<vmem>>, %arg13: memref<2x16x256xf32, #tpu.memory_space<vmem>>, %arg14: memref<2x16x256xf32, #tpu.memory_space<vmem>>) attributes {dimension_semantics = [#tpu.dimension_semantics<parallel>, #tpu.dimension_semantics<arbitrary>], iteration_bounds = array<i64: 2, 2>, scalar_prefetch = 0 : i64, scratch_operands = 1 : i64, tpu.core_type = #tpu.core_type<tc>, window_params = [{transform_indices = @transform_0, window_bounds = array<i64: 2, 16, 256>}, {transform_indices = @transform_1, window_bounds = array<i64: 2, 32, 256>}, {transform_indices = @transform_2, window_bounds = array<i64: 2, 32, 256>}, {transform_indices = @transform_3, window_bounds = array<i64: 256, 128>}, {transform_indices = @transform_4, window_bounds = array<i64: 1, 128>}, {transform_indices = @transform_5, window_bounds = array<i64: 256, 128>}, {transform_indices = @transform_6, window_bounds = array<i64: 1, 128>}, {transform_indices = @transform_7, window_bounds = array<i64: 256, 128>}, {transform_indices = @transform_8, window_bounds = array<i64: 1, 128>}, {transform_indices = @transform_9, window_bounds = array<i64: 128, 256>}, {pipeline_mode = #tpu.pipeline_mode<synchronous>, transform_indices = @transform_10, window_bounds = array<i64: 1, 256>}, {transform_indices = @transform_11, window_bounds = array<i64: 2, 16, 256>}]} {
    %c0_i32 = arith.constant 0 : i32
    %0 = arith.cmpi eq, %arg1, %c0_i32 : i32
    %1 = arith.extui %0 : i1 to i32
    %c0_i32_0 = arith.constant 0 : i32
    %2 = arith.cmpi ne, %1, %c0_i32_0 : i32
    scf.if %2 {
      %cst_38 = arith.constant 0.000000e+00 : f32
      %50 = vector.broadcast %cst_38 : f32 to vector<2x16x256xf32>
      %c0_39 = arith.constant 0 : index
      %c0_40 = arith.constant 0 : index
      %c0_41 = arith.constant 0 : index
      %51 = vector.load %arg14[%c0_39, %c0_40, %c0_41] : memref<2x16x256xf32, #tpu.memory_space<vmem>>, vector<2x16x256xf32>
      tpu.vector_store %arg14[%c0_39, %c0_40, %c0_41], %50 {strides = array<i32>} : memref<2x16x256xf32, #tpu.memory_space<vmem>>, vector<2x16x256xf32>,
    } else {
    }
    %c0 = arith.constant 0 : index
    %c0_1 = arith.constant 0 : index
    %c0_2 = arith.constant 0 : index
    %3 = vector.load %arg2[%c0, %c0_1, %c0_2] : memref<2x16x256xf32, #tpu.memory_space<vmem>>, vector<2x16x256xf32>
    %4 = vector.shape_cast %3 : vector<2x16x256xf32> to vector<32x256xf32>
    %c0_3 = arith.constant 0 : index
    %c0_4 = arith.constant 0 : index
    %c0_5 = arith.constant 0 : index
    %5 = vector.load %arg3[%c0_3, %c0_4, %c0_5] : memref<2x32x256xf32, #tpu.memory_space<vmem>>, vector<2x32x256xf32>
    %6 = vector.shape_cast %5 : vector<2x32x256xf32> to vector<64x256xf32>
    %c0_6 = arith.constant 0 : index
    %c0_7 = arith.constant 0 : index
    %c0_8 = arith.constant 0 : index
    %7 = vector.load %arg4[%c0_6, %c0_7, %c0_8] : memref<2x32x256xf32, #tpu.memory_space<vmem>>, vector<2x32x256xf32>
    %8 = vector.shape_cast %7 : vector<2x32x256xf32> to vector<64x256xf32>
    %c0_9 = arith.constant 0 : index
    %c0_10 = arith.constant 0 : index
    %9 = vector.load %arg5[%c0_9, %c0_10] : memref<256x128xf32, #tpu.memory_space<vmem>>, vector<256x128xf32>
    %cst = arith.constant dense<0.000000e+00> : vector<32x128xf32>
    %10 = tpu.matmul %4, %9, %cst {dimension_numbers = #tpu.dot_dimension_numbers<[1], [0], [0], [1], [0, 0, 1, 1], [], []>} : vector<32x256xf32>, vector<256x128xf32>, vector<32x128xf32> -> vector<32x128xf32>
    %c0_11 = arith.constant 0 : index
    %c0_12 = arith.constant 0 : index
    %11 = vector.load %arg6[%c0_11, %c0_12] : memref<1x128xf32, #tpu.memory_space<vmem>>, vector<1x128xf32>
    %12 = vector.broadcast %11 : vector<1x128xf32> to vector<32x128xf32>
    %13 = arith.addf %10, %12 : vector<32x128xf32>
    %cst_13 = arith.constant 0.0883883461 : f32
    %14 = vector.broadcast %cst_13 : f32 to vector<32x128xf32>
    %15 = arith.mulf %13, %14 : vector<32x128xf32>
    %c0_14 = arith.constant 0 : index
    %c0_15 = arith.constant 0 : index
    %16 = vector.load %arg7[%c0_14, %c0_15] : memref<256x128xf32, #tpu.memory_space<vmem>>, vector<256x128xf32>
    %cst_16 = arith.constant dense<0.000000e+00> : vector<64x128xf32>
    %17 = tpu.matmul %6, %16, %cst_16 {dimension_numbers = #tpu.dot_dimension_numbers<[1], [0], [0], [1], [0, 0, 1, 1], [], []>} : vector<64x256xf32>, vector<256x128xf32>, vector<64x128xf32> -> vector<64x128xf32>
    %c0_17 = arith.constant 0 : index
    %c0_18 = arith.constant 0 : index
    %18 = vector.load %arg8[%c0_17, %c0_18] : memref<1x128xf32, #tpu.memory_space<vmem>>, vector<1x128xf32>
    %19 = vector.broadcast %18 : vector<1x128xf32> to vector<64x128xf32>
    %20 = arith.addf %17, %19 : vector<64x128xf32>
    %c0_19 = arith.constant 0 : index
    %c0_20 = arith.constant 0 : index
    %21 = vector.load %arg9[%c0_19, %c0_20] : memref<256x128xf32, #tpu.memory_space<vmem>>, vector<256x128xf32>
    %cst_21 = arith.constant dense<0.000000e+00> : vector<64x128xf32>
    %22 = tpu.matmul %8, %21, %cst_21 {dimension_numbers = #tpu.dot_dimension_numbers<[1], [0], [0], [1], [0, 0, 1, 1], [], []>} : vector<64x256xf32>, vector<256x128xf32>, vector<64x128xf32> -> vector<64x128xf32>
    %c0_22 = arith.constant 0 : index
    %c0_23 = arith.constant 0 : index
    %23 = vector.load %arg10[%c0_22, %c0_23] : memref<1x128xf32, #tpu.memory_space<vmem>>, vector<1x128xf32>
    %24 = vector.broadcast %23 : vector<1x128xf32> to vector<64x128xf32>
    %25 = arith.addf %22, %24 : vector<64x128xf32>
    %26 = vector.shape_cast %15 : vector<32x128xf32> to vector<2x16x128xf32>
    %27 = vector.shape_cast %20 : vector<64x128xf32> to vector<2x32x128xf32>
    %28 = vector.shape_cast %25 : vector<64x128xf32> to vector<2x32x128xf32>
    "tpu.trace_start"() <{level = 10 : i32, message = "bqd,bkd->bqk"}> : () -> ()
    %cst_24 = arith.constant dense<0.000000e+00> : vector<2x16x32xf32>
    %29 = tpu.matmul %26, %27, %cst_24 {dimension_numbers = #tpu.dot_dimension_numbers<[2], [2], [1], [1], [0, 0, 0, 1, 1, 1], [0], [0]>} : vector<2x16x128xf32>, vector<2x32x128xf32>, vector<2x16x32xf32> -> vector<2x16x32xf32>
    "tpu.trace_stop"() : () -> ()
    %cst_25 = arith.constant dense<0xFF800000> : vector<2x16xf32>
    %30 = vector.multi_reduction <maximumf>, %29, %cst_25 [2] : vector<2x16x32xf32> to vector<2x16xf32>
    %31 = vector.shape_cast %30 : vector<2x16xf32> to vector<2x16x1xf32>
    %32 = vector.broadcast %31 : vector<2x16x1xf32> to vector<2x16x32xf32>
    %33 = arith.subf %29, %32 : vector<2x16x32xf32>
    %34 = math.exp %33 : vector<2x16x32xf32>
    %cst_26 = arith.constant dense<0.000000e+00> : vector<2x16xf32>
    %35 = vector.multi_reduction <add>, %34, %cst_26 [2] : vector<2x16x32xf32> to vector<2x16xf32>
    %36 = vector.shape_cast %35 : vector<2x16xf32> to vector<2x16x1xf32>
    %37 = vector.broadcast %36 : vector<2x16x1xf32> to vector<2x16x32xf32>
    %38 = arith.divf %34, %37 : vector<2x16x32xf32>
    "tpu.trace_start"() <{level = 10 : i32, message = "bqk,bkd->bqd"}> : () -> ()
    %cst_27 = arith.constant dense<0.000000e+00> : vector<2x16x128xf32>
    %39 = tpu.matmul %38, %28, %cst_27 {dimension_numbers = #tpu.dot_dimension_numbers<[2], [1], [1], [2], [0, 0, 0, 1, 1, 2], [0], [0]>} : vector<2x16x32xf32>, vector<2x32x128xf32>, vector<2x16x128xf32> -> vector<2x16x128xf32>
    "tpu.trace_stop"() : () -> ()
    %40 = vector.shape_cast %39 : vector<2x16x128xf32> to vector<32x128xf32>
    %c0_28 = arith.constant 0 : index
    %c0_29 = arith.constant 0 : index
    %c0_30 = arith.constant 0 : index
    %41 = vector.load %arg14[%c0_28, %c0_29, %c0_30] : memref<2x16x256xf32, #tpu.memory_space<vmem>>, vector<2x16x256xf32>
    %c0_31 = arith.constant 0 : index
    %c0_32 = arith.constant 0 : index
    %42 = vector.load %arg11[%c0_31, %c0_32] : memref<128x256xf32, #tpu.memory_space<vmem>>, vector<128x256xf32>
    %cst_33 = arith.constant dense<0.000000e+00> : vector<32x256xf32>
    %43 = tpu.matmul %40, %42, %cst_33 {dimension_numbers = #tpu.dot_dimension_numbers<[1], [0], [0], [1], [0, 0, 1, 1], [], []>} : vector<32x128xf32>, vector<128x256xf32>, vector<32x256xf32> -> vector<32x256xf32>
    %44 = vector.shape_cast %43 : vector<32x256xf32> to vector<2x16x256xf32>
    %45 = arith.addf %41, %44 : vector<2x16x256xf32>
    %c0_34 = arith.constant 0 : index
    %c0_35 = arith.constant 0 : index
    %c0_36 = arith.constant 0 : index
    %46 = vector.load %arg14[%c0_34, %c0_35, %c0_36] : memref<2x16x256xf32, #tpu.memory_space<vmem>>, vector<2x16x256xf32>
    tpu.vector_store %arg14[%c0_34, %c0_35, %c0_36], %45 {strides = array<i32>} : memref<2x16x256xf32, #tpu.memory_space<vmem>>, vector<2x16x256xf32>,
    %c1_i32 = arith.constant 1 : i32
    %47 = arith.cmpi eq, %arg1, %c1_i32 : i32
    %48 = arith.extui %47 : i1 to i32
    %c0_i32_37 = arith.constant 0 : i32
    %49 = arith.cmpi ne, %48, %c0_i32_37 : i32
    scf.if %49 {
      %c0_38 = arith.constant 0 : index
      %c0_39 = arith.constant 0 : index
      %c0_40 = arith.constant 0 : index
      %50 = vector.load %arg14[%c0_38, %c0_39, %c0_40] : memref<2x16x256xf32, #tpu.memory_space<vmem>>, vector<2x16x256xf32>
      %c0_41 = arith.constant 0 : index
      %c0_42 = arith.constant 0 : index
      %51 = vector.load %arg12[%c0_41, %c0_42] : memref<1x256xf32, #tpu.memory_space<vmem>>, vector<1x256xf32>
      %52 = vector.shape_cast %51 : vector<1x256xf32> to vector<1x1x256xf32>
      %53 = vector.broadcast %52 : vector<1x1x256xf32> to vector<2x16x256xf32>
      %54 = arith.addf %50, %53 : vector<2x16x256xf32>
      %c0_43 = arith.constant 0 : index
      %c0_44 = arith.constant 0 : index
      %c0_45 = arith.constant 0 : index
      %55 = vector.load %arg13[%c0_43, %c0_44, %c0_45] : memref<2x16x256xf32, #tpu.memory_space<vmem>>, vector<2x16x256xf32>
      tpu.vector_store %arg13[%c0_43, %c0_44, %c0_45], %54 {strides = array<i32>} : memref<2x16x256xf32, #tpu.memory_space<vmem>>, vector<2x16x256xf32>,
    } else {
    }
    return
  }
  func.func @transform_0(%arg0: i32, %arg1: i32) -> (i32, i32, i32) {
    %c0_i32 = arith.constant 0 : i32
    %c0_i32_0 = arith.constant 0 : i32
    %c0_i32_1 = arith.constant 0 : i32
    return %arg0, %c0_i32, %c0_i32_0 : i32, i32, i32
  }
  func.func @transform_1(%arg0: i32, %arg1: i32) -> (i32, i32, i32) {
    %c0_i32 = arith.constant 0 : i32
    %c0_i32_0 = arith.constant 0 : i32
    %c0_i32_1 = arith.constant 0 : i32
    return %arg0, %c0_i32, %c0_i32_0 : i32, i32, i32
  }
  func.func @transform_2(%arg0: i32, %arg1: i32) -> (i32, i32, i32) {
    %c0_i32 = arith.constant 0 : i32
    %c0_i32_0 = arith.constant 0 : i32
    %c0_i32_1 = arith.constant 0 : i32
    return %arg0, %c0_i32, %c0_i32_0 : i32, i32, i32
  }
  func.func @transform_3(%arg0: i32, %arg1: i32) -> (i32, i32) {
    %c0_i32 = arith.constant 0 : i32
    %c0_i32_0 = arith.constant 0 : i32
    return %c0_i32, %arg1 : i32, i32
  }
  func.func @transform_4(%arg0: i32, %arg1: i32) -> (i32, i32) {
    %c0_i32 = arith.constant 0 : i32
    %c0_i32_0 = arith.constant 0 : i32
    return %c0_i32, %arg1 : i32, i32
  }
  func.func @transform_5(%arg0: i32, %arg1: i32) -> (i32, i32) {
    %c0_i32 = arith.constant 0 : i32
    %c0_i32_0 = arith.constant 0 : i32
    return %c0_i32, %arg1 : i32, i32
  }
  func.func @transform_6(%arg0: i32, %arg1: i32) -> (i32, i32) {
    %c0_i32 = arith.constant 0 : i32
    %c0_i32_0 = arith.constant 0 : i32
    return %c0_i32, %arg1 : i32, i32
  }
  func.func @transform_7(%arg0: i32, %arg1: i32) -> (i32, i32) {
    %c0_i32 = arith.constant 0 : i32
    %c0_i32_0 = arith.constant 0 : i32
    return %c0_i32, %arg1 : i32, i32
  }
  func.func @transform_8(%arg0: i32, %arg1: i32) -> (i32, i32) {
    %c0_i32 = arith.constant 0 : i32
    %c0_i32_0 = arith.constant 0 : i32
    return %c0_i32, %arg1 : i32, i32
  }
  func.func @transform_9(%arg0: i32, %arg1: i32) -> (i32, i32) {
    %c0_i32 = arith.constant 0 : i32
    %c0_i32_0 = arith.constant 0 : i32
    return %arg1, %c0_i32 : i32, i32
  }
  func.func @transform_10(%arg0: i32, %arg1: i32) -> (i32, i32) {
    %c0_i32 = arith.constant 0 : i32
    %c0_i32_0 = arith.constant 0 : i32
    %c0_i32_1 = arith.constant 0 : i32
    return %c0_i32, %c0_i32_0 : i32, i32
  }
  func.func @transform_11(%arg0: i32, %arg1: i32) -> (i32, i32, i32) {
    %c0_i32 = arith.constant 0 : i32
    %c0_i32_0 = arith.constant 0 : i32
    %c0_i32_1 = arith.constant 0 : i32
    return %arg0, %c0_i32, %c0_i32_0 : i32, i32, i32
  }
}

</mosaic_0001>

<llo_original>
// kernel: tpu_custom_call.1
$region0: #{tpu_custom_call.1}
  #allocation0 [shape = 'u32[]', space=smem, size = 0x4, offset = 0x4, fixed_abs, tag = 'smem constant byte address 0x4 - core index']
  #allocation1 [shape = 'u32[72,128]{1,0:T(1,128)}', space=vmem, size = 0x9000, scoped, tag = 'internal scratch']
  #allocation2 [shape = 'f32[2,16,256]{2,1,0:T(8,128)}', space=vmem, size = 0x8000, scoped, tag = 'scratch operand']
  %s0 = inlined_call_operand.hbm [shape: f32[4,16,256], index: 0, kind: input, shape index: {}]
  %s1 = inlined_call_operand.hbm [shape: f32[4,32,256], index: 1, kind: input, shape index: {}]
  %s2 = inlined_call_operand.hbm [shape: f32[4,32,256], index: 2, kind: input, shape index: {}]
  %s3 = inlined_call_operand.hbm [shape: f32[256,256], index: 3, kind: input, shape index: {}]
  %s4 = inlined_call_operand.vmem [shape: f32[1,256], index: 4, kind: input, shape index: {}]
  %s5 = inlined_call_operand.hbm [shape: f32[256,256], index: 5, kind: input, shape index: {}]
  %s6 = inlined_call_operand.vmem [shape: f32[1,256], index: 6, kind: input, shape index: {}]
  %s7 = inlined_call_operand.hbm [shape: f32[256,256], index: 7, kind: input, shape index: {}]
  %s8 = inlined_call_operand.vmem [shape: f32[1,256], index: 8, kind: input, shape index: {}]
  %s9 = inlined_call_operand.hbm [shape: f32[256,256], index: 9, kind: input, shape index: {}]
  %s10 = inlined_call_operand.vmem [shape: f32[1,256], index: 10, kind: input, shape index: {}]
  %s11 = inlined_call_operand.hbm [shape: f32[4,16,256], index: 11, kind: output, shape index: {}]
  %s12 = sld [smem:[#allocation0]]
  $region113: #{tpu_custom_call.1} parent=0
    _
  %s14 = ssub.s32 1, %s12
  %s15 = scalar_select 0, %s14, %s12
  $region1: #{tpu_custom_call.1} parent=0
    #allocation3 [shape = 'u8[65536]{0}', space=vmem, size = 0x10000, scoped, tag = 'input window, operand 0']
    #allocation4 [shape = 's32[2]{0}', space=sflag, size = 0x8, scoped, tag = 'scoped memory for tpu_custom_call.1']
    #allocation5 [shape = 's32[2]{0}', space=sflag, size = 0x8, scoped, tag = 'scoped memory for tpu_custom_call.1']
    #allocation6 [shape = 'u8[131072]{0}', space=vmem, size = 0x20000, scoped, tag = 'input window, operand 1']
    #allocation7 [shape = 's32[2]{0}', space=sflag, size = 0x8, scoped, tag = 'scoped memory for tpu_custom_call.1']
    #allocation8 [shape = 'u8[131072]{0}', space=vmem, size = 0x20000, scoped, tag = 'input window, operand 2']
    #allocation9 [shape = 'u8[262144]{0}', space=vmem, size = 0x40000, scoped, tag = 'input window, operand 3']
    #allocation10 [shape = 's32[2]{0}', space=sflag, size = 0x8, scoped, tag = 'scoped memory for tpu_custom_call.1']
    #allocation11 [shape = 'u8[262144]{0}', space=vmem, size = 0x40000, scoped, tag = 'input window, operand 5']
    #allocation12 [shape = 'u8[262144]{0}', space=vmem, size = 0x40000, scoped, tag = 'input window, operand 7']
    #allocation13 [shape = 's32[2]{0}', space=sflag, size = 0x8, scoped, tag = 'scoped memory for tpu_custom_call.1']
    #allocation14 [shape = 'u8[262144]{0}', space=vmem, size = 0x40000, scoped, tag = 'input window, operand 9']
    #allocation15 [shape = 'u8[65536]{0}', space=vmem, size = 0x10000, scoped, tag = 'output window, operand 0']
    %16 = vsyncpa [#allocation4], 0
    %s17 = scalar_lea.sflag [#allocation4], 1
    %18 = vsyncpa %s17, 0
    %19 = vsyncpa [#allocation7], 0
    %s20 = scalar_lea.sflag [#allocation7], 1
    %21 = vsyncpa %s20, 0
    %22 = vsyncpa [#allocation10], 0
    %s23 = scalar_lea.sflag [#allocation10], 1
    %24 = vsyncpa %s23, 0
    %25 = vsyncpa [#allocation13], 0
    %s26 = scalar_lea.sflag [#allocation13], 1
    %27 = vsyncpa %s26, 0
    %28 = vsyncpa [#allocation5], 0
    %s29 = scalar_lea.sflag [#allocation5], 1
    %30 = vsyncpa %s29, 0
    loop: start=0, step=1, limit=6
    $region2: #{tpu_custom_call.1} parent=1 // loop_pre_header
      _
    $region3: #{tpu_custom_call.1} parent=1 // loop_header
      %s32 = sphi 0, %s36
      %p33 = scmp.ge.s32.totalorder %s32, 6
      %s39 = sphi 0, %s51
      %s40 = sphi 0, %s47
      %s41 = sphi 0, %s39
      %s42 = sphi 0, %s40
      %s43 = sphi 0, %s41
      %s44 = sphi 0, %s42
      %s54 = sphi 0, %s56
      %s57 = sphi 0, %s54
      %s58 = sphi 0, %s57
      %s74 = sphi 0, %s58
      %s80 = sphi 0, %s82
      %s83 = sphi 0, %s80
      %s84 = sphi 0, %s83
      %s100 = sphi 0, %s84
      %s106 = sphi 0, %s108
      %s109 = sphi 0, %s106
      %s110 = sphi 0, %s109
      %s126 = sphi 0, %s110
      %s132 = sphi 0, %s134
      %s135 = sphi 0, %s132
      %s136 = sphi 0, %s135
      %s152 = sphi 0, %s136
      %s158 = sphi 0, %s160
      %s161 = sphi 0, %s158
      %s162 = sphi 0, %s161
      %s178 = sphi 0, %s162
      %s184 = sphi 0, %s186
      %s187 = sphi 0, %s184
      %s188 = sphi 0, %s187
      %s204 = sphi 0, %s188
      %s210 = sphi 0, %s212
      %s213 = sphi 0, %s210
      %s214 = sphi 0, %s213
      %s230 = sphi 0, %s214
      %s236 = sphi 0, %s238
      %s239 = sphi 0, %s236
      %s240 = sphi 0, %s239
      %s256 = sphi 0, %s240
      %s262 = sphi 0, %s264
      %s265 = sphi 0, %s262
      %s266 = sphi 0, %s265
      %s282 = sphi 0, %s266
      %s288 = sphi 0, %s290
      %s291 = sphi 0, %s288
      %s292 = sphi 0, %s291
      %s308 = sphi 0, %s292
      %s312 = sphi 0, %s312
      %s314 = sphi 0, %s312
      %s315 = sphi 0, %s314
      %s329 = sphi 0, %s315
      %s335 = sphi 0, %s337
      %s338 = sphi 0, %s335
      %s339 = sphi 0, %s338
      %s355 = sphi 0, %s339
    $region4: #{tpu_custom_call.1} parent=1 // loop_header_branch
      %35 = sbr.rel (%p33) target = $region8
    $region5: #{tpu_custom_call.1} parent=1 // loop_body
      %s37 = ssub.s32 %s32, 1
      %s38 = ssub.s32 %s32, 2
      %s45 = sadd.s32 1, %s40
      %p46 = scmp.ge.s32.totalorder %s45, 2
      %s47 = scalar_select %p46, 0, %s45
      %s48 = sadd.s32 1, %s39
      %s49 = scalar_select %p46, %s48, %s39
      %p50 = scmp.ge.s32.totalorder %s49, 2
      %s51 = scalar_select %p50, 0, %s49
      %s52 = ssub.s32 %s39, %s51
      %p53 = scmp.eq.s32.totalorder %s52, 0
      %s55 = sadd.s32 %s54, 1
      %s56 = scalar_select %p53, %s54, %s55
      %p59 = pneg %p53
      %p60 = scmp.eq.s32.totalorder %s32, 3
      %p61 = por %p59, %p60
      %p62 = scmp.ne.s32.totalorder %s54, %s57
      %p63 = scmp.eq.s32.totalorder %s32, 0
      %p64 = por %p62, %p63
      %p65 = scmp.ne.s32.totalorder %s54, %s57
      %p66 = scmp.eq.s32.totalorder %s37, 3
      %p67 = por %p65, %p66
      %p68 = scmp.ne.s32.totalorder %s57, %s58
      %p69 = scmp.eq.s32.totalorder %s37, 0
      %p70 = por %p68, %p69
      %p71 = scmp.ne.s32.totalorder %s57, %s58
      %p72 = scmp.eq.s32.totalorder %s38, 3
      %p73 = por %p71, %p72
      %p75 = scmp.ne.s32.totalorder %s58, %s74
      %p76 = scmp.eq.s32.totalorder %s38, 0
      %p77 = por %p75, %p76
      %s78 = ssub.s32 %s39, %s51
      %p79 = scmp.eq.s32.totalorder %s78, 0
      %s81 = sadd.s32 %s80, 1
      %s82 = scalar_select %p79, %s80, %s81
      %p85 = pneg %p79
      %p86 = scmp.eq.s32.totalorder %s32, 3
      %p87 = por %p85, %p86
      %p88 = scmp.ne.s32.totalorder %s80, %s83
      %p89 = scmp.eq.s32.totalorder %s32, 0
      %p90 = por %p88, %p89
      %p91 = scmp.ne.s32.totalorder %s80, %s83
      %p92 = scmp.eq.s32.totalorder %s37, 3
      %p93 = por %p91, %p92
      %p94 = scmp.ne.s32.totalorder %s83, %s84
      %p95 = scmp.eq.s32.totalorder %s37, 0
      %p96 = por %p94, %p95
      %p97 = scmp.ne.s32.totalorder %s83, %s84
      %p98 = scmp.eq.s32.totalorder %s38, 3
      %p99 = por %p97, %p98
      %p101 = scmp.ne.s32.totalorder %s84, %s100
      %p102 = scmp.eq.s32.totalorder %s38, 0
      %p103 = por %p101, %p102
      %s104 = ssub.s32 %s39, %s51
      %p105 = scmp.eq.s32.totalorder %s104, 0
      %s107 = sadd.s32 %s106, 1
      %s108 = scalar_select %p105, %s106, %s107
      %p111 = pneg %p105
      %p112 = scmp.eq.s32.totalorder %s32, 3
      %p113 = por %p111, %p112
      %p114 = scmp.ne.s32.totalorder %s106, %s109
      %p115 = scmp.eq.s32.totalorder %s32, 0
      %p116 = por %p114, %p115
      %p117 = scmp.ne.s32.totalorder %s106, %s109
      %p118 = scmp.eq.s32.totalorder %s37, 3
      %p119 = por %p117, %p118
      %p120 = scmp.ne.s32.totalorder %s109, %s110
      %p121 = scmp.eq.s32.totalorder %s37, 0
      %p122 = por %p120, %p121
      %p123 = scmp.ne.s32.totalorder %s109, %s110
      %p124 = scmp.eq.s32.totalorder %s38, 3
      %p125 = por %p123, %p124
      %p127 = scmp.ne.s32.totalorder %s110, %s126
      %p128 = scmp.eq.s32.totalorder %s38, 0
      %p129 = por %p127, %p128
      %s130 = ssub.s32 %s40, %s47
      %p131 = scmp.eq.s32.totalorder %s130, 0
      %s133 = sadd.s32 %s132, 1
      %s134 = scalar_select %p131, %s132, %s133
      %p137 = pneg %p131
      %p138 = scmp.eq.s32.totalorder %s32, 3
      %p139 = por %p137, %p138
      %p140 = scmp.ne.s32.totalorder %s132, %s135
      %p141 = scmp.eq.s32.totalorder %s32, 0
      %p142 = por %p140, %p141
      %p143 = scmp.ne.s32.totalorder %s132, %s135
      %p144 = scmp.eq.s32.totalorder %s37, 3
      %p145 = por %p143, %p144
      %p146 = scmp.ne.s32.totalorder %s135, %s136
      %p147 = scmp.eq.s32.totalorder %s37, 0
      %p148 = por %p146, %p147
      %p149 = scmp.ne.s32.totalorder %s135, %s136
      %p150 = scmp.eq.s32.totalorder %s38, 3
      %p151 = por %p149, %p150
      %p153 = scmp.ne.s32.totalorder %s136, %s152
      %p154 = scmp.eq.s32.totalorder %s38, 0
      %p155 = por %p153, %p154
      %s156 = ssub.s32 %s40, %s47
      %p157 = scmp.eq.s32.totalorder %s156, 0
      %s159 = sadd.s32 %s158, 1
      %s160 = scalar_select %p157, %s158, %s159
      %p163 = pneg %p157
      %p164 = scmp.eq.s32.totalorder %s32, 3
      %p165 = por %p163, %p164
      %p166 = scmp.ne.s32.totalorder %s158, %s161
      %p167 = scmp.eq.s32.totalorder %s32, 0
      %p168 = por %p166, %p167
      %p169 = scmp.ne.s32.totalorder %s158, %s161
      %p170 = scmp.eq.s32.totalorder %s37, 3
      %p171 = por %p169, %p170
      %p172 = scmp.ne.s32.totalorder %s161, %s162
      %p173 = scmp.eq.s32.totalorder %s37, 0
      %p174 = por %p172, %p173
      %p175 = scmp.ne.s32.totalorder %s161, %s162
      %p176 = scmp.eq.s32.totalorder %s38, 3
      %p177 = por %p175, %p176
      %p179 = scmp.ne.s32.totalorder %s162, %s178
      %p180 = scmp.eq.s32.totalorder %s38, 0
      %p181 = por %p179, %p180
      %s182 = ssub.s32 %s40, %s47
      %p183 = scmp.eq.s32.totalorder %s182, 0
      %s185 = sadd.s32 %s184, 1
      %s186 = scalar_select %p183, %s184, %s185
      %p189 = pneg %p183
      %p190 = scmp.eq.s32.totalorder %s32, 3
      %p191 = por %p189, %p190
      %p192 = scmp.ne.s32.totalorder %s184, %s187
      %p193 = scmp.eq.s32.totalorder %s32, 0
      %p194 = por %p192, %p193
      %p195 = scmp.ne.s32.totalorder %s184, %s187
      %p196 = scmp.eq.s32.totalorder %s37, 3
      %p197 = por %p195, %p196
      %p198 = scmp.ne.s32.totalorder %s187, %s188
      %p199 = scmp.eq.s32.totalorder %s37, 0
      %p200 = por %p198, %p199
      %p201 = scmp.ne.s32.totalorder %s187, %s188
      %p202 = scmp.eq.s32.totalorder %s38, 3
      %p203 = por %p201, %p202
      %p205 = scmp.ne.s32.totalorder %s188, %s204
      %p206 = scmp.eq.s32.totalorder %s38, 0
      %p207 = por %p205, %p206
      %s208 = ssub.s32 %s40, %s47
      %p209 = scmp.eq.s32.totalorder %s208, 0
      %s211 = sadd.s32 %s210, 1
      %s212 = scalar_select %p209, %s210, %s211
      %p215 = pneg %p209
      %p216 = scmp.eq.s32.totalorder %s32, 3
      %p217 = por %p215, %p216
      %p218 = scmp.ne.s32.totalorder %s210, %s213
      %p219 = scmp.eq.s32.totalorder %s32, 0
      %p220 = por %p218, %p219
      %p221 = scmp.ne.s32.totalorder %s210, %s213
      %p222 = scmp.eq.s32.totalorder %s37, 3
      %p223 = por %p221, %p222
      %p224 = scmp.ne.s32.totalorder %s213, %s214
      %p225 = scmp.eq.s32.totalorder %s37, 0
      %p226 = por %p224, %p225
      %p227 = scmp.ne.s32.totalorder %s213, %s214
      %p228 = scmp.eq.s32.totalorder %s38, 3
      %p229 = por %p227, %p228
      %p231 = scmp.ne.s32.totalorder %s214, %s230
      %p232 = scmp.eq.s32.totalorder %s38, 0
      %p233 = por %p231, %p232
      %s234 = ssub.s32 %s40, %s47
      %p235 = scmp.eq.s32.totalorder %s234, 0
      %s237 = sadd.s32 %s236, 1
      %s238 = scalar_select %p235, %s236, %s237
      %p241 = pneg %p235
      %p242 = scmp.eq.s32.totalorder %s32, 3
      %p243 = por %p241, %p242
      %p244 = scmp.ne.s32.totalorder %s236, %s239
      %p245 = scmp.eq.s32.totalorder %s32, 0
      %p246 = por %p244, %p245
      %p247 = scmp.ne.s32.totalorder %s236, %s239
      %p248 = scmp.eq.s32.totalorder %s37, 3
      %p249 = por %p247, %p248
      %p250 = scmp.ne.s32.totalorder %s239, %s240
      %p251 = scmp.eq.s32.totalorder %s37, 0
      %p252 = por %p250, %p251
      %p253 = scmp.ne.s32.totalorder %s239, %s240
      %p254 = scmp.eq.s32.totalorder %s38, 3
      %p255 = por %p253, %p254
      %p257 = scmp.ne.s32.totalorder %s240, %s256
      %p258 = scmp.eq.s32.totalorder %s38, 0
      %p259 = por %p257, %p258
      %s260 = ssub.s32 %s40, %s47
      %p261 = scmp.eq.s32.totalorder %s260, 0
      %s263 = sadd.s32 %s262, 1
      %s264 = scalar_select %p261, %s262, %s263
      %p267 = pneg %p261
      %p268 = scmp.eq.s32.totalorder %s32, 3
      %p269 = por %p267, %p268
      %p270 = scmp.ne.s32.totalorder %s262, %s265
      %p271 = scmp.eq.s32.totalorder %s32, 0
      %p272 = por %p270, %p271
      %p273 = scmp.ne.s32.totalorder %s262, %s265
      %p274 = scmp.eq.s32.totalorder %s37, 3
      %p275 = por %p273, %p274
      %p276 = scmp.ne.s32.totalorder %s265, %s266
      %p277 = scmp.eq.s32.totalorder %s37, 0
      %p278 = por %p276, %p277
      %p279 = scmp.ne.s32.totalorder %s265, %s266
      %p280 = scmp.eq.s32.totalorder %s38, 3
      %p281 = por %p279, %p280
      %p283 = scmp.ne.s32.totalorder %s266, %s282
      %p284 = scmp.eq.s32.totalorder %s38, 0
      %p285 = por %p283, %p284
      %s286 = ssub.s32 %s40, %s47
      %p287 = scmp.eq.s32.totalorder %s286, 0
      %s289 = sadd.s32 %s288, 1
      %s290 = scalar_select %p287, %s288, %s289
      %p293 = pneg %p287
      %p294 = scmp.eq.s32.totalorder %s32, 3
      %p295 = por %p293, %p294
      %p296 = scmp.ne.s32.totalorder %s288, %s291
      %p297 = scmp.eq.s32.totalorder %s32, 0
      %p298 = por %p296, %p297
      %p299 = scmp.ne.s32.totalorder %s288, %s291
      %p300 = scmp.eq.s32.totalorder %s37, 3
      %p301 = por %p299, %p300
      %p302 = scmp.ne.s32.totalorder %s291, %s292
      %p303 = scmp.eq.s32.totalorder %s37, 0
      %p304 = por %p302, %p303
      %p305 = scmp.ne.s32.totalorder %s291, %s292
      %p306 = scmp.eq.s32.totalorder %s38, 3
      %p307 = por %p305, %p306
      %p309 = scmp.ne.s32.totalorder %s292, %s308
      %p310 = scmp.eq.s32.totalorder %s38, 0
      %p311 = por %p309, %p310
      %s313 = sadd.s32 %s312, 1
      %p316 = scmp.eq.s32.totalorder %s32, 3
      %p317 = scmp.ne.s32.totalorder %s312, %s314
      %p318 = scmp.eq.s32.totalorder %s32, 0
      %p319 = por %p317, %p318
      %p320 = scmp.ne.s32.totalorder %s312, %s314
      %p321 = scmp.eq.s32.totalorder %s37, 3
      %p322 = por %p320, %p321
      %p323 = scmp.ne.s32.totalorder %s314, %s315
      %p324 = scmp.eq.s32.totalorder %s37, 0
      %p325 = por %p323, %p324
      %p326 = scmp.ne.s32.totalorder %s314, %s315
      %p327 = scmp.eq.s32.totalorder %s38, 3
      %p328 = por %p326, %p327
      %p330 = scmp.ne.s32.totalorder %s315, %s329
      %p331 = scmp.eq.s32.totalorder %s38, 0
      %p332 = por %p330, %p331
      %s333 = ssub.s32 %s39, %s51
      %p334 = scmp.eq.s32.totalorder %s333, 0
      %s336 = sadd.s32 %s335, 1
      %s337 = scalar_select %p334, %s335, %s336
      %p340 = pneg %p334
      %p341 = scmp.eq.s32.totalorder %s32, 3
      %p342 = por %p340, %p341
      %p343 = scmp.ne.s32.totalorder %s335, %s338
      %p344 = scmp.eq.s32.totalorder %s32, 0
      %p345 = por %p343, %p344
      %p346 = scmp.ne.s32.totalorder %s335, %s338
      %p347 = scmp.eq.s32.totalorder %s37, 3
      %p348 = por %p346, %p347
      %p349 = scmp.ne.s32.totalorder %s338, %s339
      %p350 = scmp.eq.s32.totalorder %s37, 0
      %p351 = por %p349, %p350
      %p352 = scmp.ne.s32.totalorder %s338, %s339
      %p353 = scmp.eq.s32.totalorder %s38, 3
      %p354 = por %p352, %p353
      %p356 = scmp.ne.s32.totalorder %s339, %s355
      %p357 = scmp.eq.s32.totalorder %s38, 0
      %p358 = por %p356, %p357
      %p359 = scmp.le.s32.totalorder 1, %s32
      %p360 = scmp.lt.s32.totalorder %s32, 5
      %p361 = pnand %p359, %p360
      %p362 = pneg %p361
      // Predicated region
      $region9: #{tpu_custom_call.1} parent=5 // pred_check
        _
      $region10: #{tpu_custom_call.1} parent=5 // pred_check_branch
        %364 = sbr.rel (%p361) target = $region12
      $region11: #{tpu_custom_call.1} parent=5 // pred_region
        %s365 = ssub.s32 %s32, 1
        // Predicated region
        $region13: #{tpu_custom_call.1} parent=11 // pred_check
          %p366 = pneg %p325
        $region14: #{tpu_custom_call.1} parent=11 // pred_check_branch
          %368 = sbr.rel (%p366) target = $region16
        $region15: #{tpu_custom_call.1} parent=11 // pred_region
          _
        $region16: #{tpu_custom_call.1} parent=11 // pred_fallthru
          _
      $region12: #{tpu_custom_call.1} parent=5 // pred_fallthru
        _
      %p369 = scmp.lt.s32.totalorder %s32, 4
      // Predicated region
      $region17: #{tpu_custom_call.1} parent=5 // pred_check
        %p370 = pneg %p369
      $region18: #{tpu_custom_call.1} parent=5 // pred_check_branch
        %372 = sbr.rel (%p370) target = $region20
      $region19: #{tpu_custom_call.1} parent=5 // pred_region
        // Predicated region
        $region21: #{tpu_custom_call.1} parent=19 // pred_check
          %p373 = pneg %p64
        $region22: #{tpu_custom_call.1} parent=19 // pred_check_branch
          %375 = sbr.rel (%p373) target = $region24
        $region23: #{tpu_custom_call.1} parent=19 // pred_region
          %s376 = sand.u32 %s54, 1
          %s377 = scalar_lea.sflag [#allocation4], %s376
          %s378 = sand.u32 %s54, 1
          %s379 = smul.addr %s378, 64
          %s380 = scalar_lea.vmem [#allocation3], %s379
          %s381 = smul.u32 2, %s39
          %383 = vsyncadd %s377, 0
          %s384 = smul.addr %s381, 4
          %s385 = smul.addr %s384, 8
          %s386 = scalar_lea.hbm %s0, %s385
          %s387 = sshll.u32 %s386, 4
          %s388 = int_to_ptr.hbm [resolvable:$true] %s387
          %s389 = sshll.u32 %s380, 4
          %s390 = int_to_ptr.vmem [resolvable:$true] %s389
          %395 = dma.hbm_to_vmem [thread:$0]  %s388, 1024, %s390, %s377, 256, 256, 16
        $region24: #{tpu_custom_call.1} parent=19 // pred_fallthru
          _
        // Predicated region
        $region25: #{tpu_custom_call.1} parent=19 // pred_check
          %p396 = pneg %p90
        $region26: #{tpu_custom_call.1} parent=19 // pred_check_branch
          %398 = sbr.rel (%p396) target = $region28
        $region27: #{tpu_custom_call.1} parent=19 // pred_region
          %s399 = sand.u32 %s32, 1
          %s400 = scalar_lea.sflag [#allocation7], %s399
          %s401 = sand.u32 %s80, 1
          %s402 = smul.addr %s401, 128
          %s403 = scalar_lea.vmem [#allocation6], %s402
          %s404 = smul.u32 2, %s39
          %406 = vsyncadd %s400, 0
          %s407 = smul.addr %s404, 8
          %s408 = smul.addr %s407, 8
          %s409 = scalar_lea.hbm %s1, %s408
          %s410 = sshll.u32 %s409, 4
          %s411 = int_to_ptr.hbm [resolvable:$true] %s410
          %s412 = sshll.u32 %s403, 4
          %s413 = int_to_ptr.vmem [resolvable:$true] %s412
          %418 = dma.hbm_to_vmem [thread:$0]  %s411, 2048, %s413, %s400, 256, 256, 16
        $region28: #{tpu_custom_call.1} parent=19 // pred_fallthru
          _
        // Predicated region
        $region29: #{tpu_custom_call.1} parent=19 // pred_check
          %p419 = pneg %p116
        $region30: #{tpu_custom_call.1} parent=19 // pred_check_branch
          %421 = sbr.rel (%p419) target = $region32
        $region31: #{tpu_custom_call.1} parent=19 // pred_region
          %s422 = sand.u32 %s32, 1
          %s423 = scalar_lea.sflag [#allocation7], %s422
          %s424 = sand.u32 %s106, 1
          %s425 = smul.addr %s424, 128
          %s426 = scalar_lea.vmem [#allocation8], %s425
          %s427 = smul.u32 2, %s39
          %429 = vsyncadd %s423, 0
          %s430 = smul.addr %s427, 8
          %s431 = smul.addr %s430, 8
          %s432 = scalar_lea.hbm %s2, %s431
          %s433 = sshll.u32 %s432, 4
          %s434 = int_to_ptr.hbm [resolvable:$true] %s433
          %s435 = sshll.u32 %s426, 4
          %s436 = int_to_ptr.vmem [resolvable:$true] %s435
          %441 = dma.hbm_to_vmem [thread:$0]  %s434, 2048, %s436, %s423, 256, 256, 16
        $region32: #{tpu_custom_call.1} parent=19 // pred_fallthru
          _
        // Predicated region
        $region33: #{tpu_custom_call.1} parent=19 // pred_check
          %p442 = pneg %p142
        $region34: #{tpu_custom_call.1} parent=19 // pred_check_branch
          %444 = sbr.rel (%p442) target = $region36
        $region35: #{tpu_custom_call.1} parent=19 // pred_region
          %s445 = sand.u32 %s32, 1
          %s446 = scalar_lea.sflag [#allocation10], %s445
          %s447 = sand.u32 %s132, 1
          %s448 = smul.addr %s447, 256
          %s449 = scalar_lea.vmem [#allocation9], %s448
          %451 = vsyncadd %s446, 0
          %s452 = smul.addr %s40, 8
          %s453 = scalar_lea.hbm %s3, %s452
          %s454 = sshll.u32 %s453, 4
          %s455 = int_to_ptr.hbm [resolvable:$true] %s454
          %s456 = sshll.u32 %s449, 4
          %s457 = int_to_ptr.vmem [resolvable:$true] %s456
          %462 = dma.hbm_to_vmem [thread:$0]  %s455, 4096, %s457, %s446, 256, 128, 8
        $region36: #{tpu_custom_call.1} parent=19 // pred_fallthru
          _
        // Predicated region
        $region37: #{tpu_custom_call.1} parent=19 // pred_check
          %p463 = pneg %p168
        $region38: #{tpu_custom_call.1} parent=19 // pred_check_branch
          %465 = sbr.rel (%p463) target = $region40
        $region39: #{tpu_custom_call.1} parent=19 // pred_region
          %p466 = scmp.lt.s32.totalorder %s40, 1
          %s467 = scalar_select %p466, %s40, 1
          %s468 = scalar_lea.vmem %s4, %s467
        $region40: #{tpu_custom_call.1} parent=19 // pred_fallthru
          _
        // Predicated region
        $region41: #{tpu_custom_call.1} parent=19 // pred_check
          %p469 = pneg %p194
        $region42: #{tpu_custom_call.1} parent=19 // pred_check_branch
          %471 = sbr.rel (%p469) target = $region44
        $region43: #{tpu_custom_call.1} parent=19 // pred_region
          %s472 = sand.u32 %s32, 1
          %s473 = scalar_lea.sflag [#allocation10], %s472
          %s474 = sand.u32 %s184, 1
          %s475 = smul.addr %s474, 256
          %s476 = scalar_lea.vmem [#allocation11], %s475
          %478 = vsyncadd %s473, 0
          %s479 = smul.addr %s40, 8
          %s480 = scalar_lea.hbm %s5, %s479
          %s481 = sshll.u32 %s480, 4
          %s482 = int_to_ptr.hbm [resolvable:$true] %s481
          %s483 = sshll.u32 %s476, 4
          %s484 = int_to_ptr.vmem [resolvable:$true] %s483
          %489 = dma.hbm_to_vmem [thread:$0]  %s482, 4096, %s484, %s473, 256, 128, 8
        $region44: #{tpu_custom_call.1} parent=19 // pred_fallthru
          _
        // Predicated region
        $region45: #{tpu_custom_call.1} parent=19 // pred_check
          %p490 = pneg %p220
        $region46: #{tpu_custom_call.1} parent=19 // pred_check_branch
          %492 = sbr.rel (%p490) target = $region48
        $region47: #{tpu_custom_call.1} parent=19 // pred_region
          %p493 = scmp.lt.s32.totalorder %s40, 1
          %s494 = scalar_select %p493, %s40, 1
          %s495 = scalar_lea.vmem %s6, %s494
        $region48: #{tpu_custom_call.1} parent=19 // pred_fallthru
          _
        // Predicated region
        $region49: #{tpu_custom_call.1} parent=19 // pred_check
          %p496 = pneg %p246
        $region50: #{tpu_custom_call.1} parent=19 // pred_check_branch
          %498 = sbr.rel (%p496) target = $region52
        $region51: #{tpu_custom_call.1} parent=19 // pred_region
          %s499 = sand.u32 %s32, 1
          %s500 = scalar_lea.sflag [#allocation13], %s499
          %s501 = sand.u32 %s236, 1
          %s502 = smul.addr %s501, 256
          %s503 = scalar_lea.vmem [#allocation12], %s502
          %505 = vsyncadd %s500, 0
          %s506 = smul.addr %s40, 8
          %s507 = scalar_lea.hbm %s7, %s506
          %s508 = sshll.u32 %s507, 4
          %s509 = int_to_ptr.hbm [resolvable:$true] %s508
          %s510 = sshll.u32 %s503, 4
          %s511 = int_to_ptr.vmem [resolvable:$true] %s510
          %516 = dma.hbm_to_vmem [thread:$0]  %s509, 4096, %s511, %s500, 256, 128, 8
        $region52: #{tpu_custom_call.1} parent=19 // pred_fallthru
          _
        // Predicated region
        $region53: #{tpu_custom_call.1} parent=19 // pred_check
          %p517 = pneg %p272
        $region54: #{tpu_custom_call.1} parent=19 // pred_check_branch
          %519 = sbr.rel (%p517) target = $region56
        $region55: #{tpu_custom_call.1} parent=19 // pred_region
          %p520 = scmp.lt.s32.totalorder %s40, 1
          %s521 = scalar_select %p520, %s40, 1
          %s522 = scalar_lea.vmem %s8, %s521
        $region56: #{tpu_custom_call.1} parent=19 // pred_fallthru
          _
        // Predicated region
        $region57: #{tpu_custom_call.1} parent=19 // pred_check
          %p523 = pneg %p298
        $region58: #{tpu_custom_call.1} parent=19 // pred_check_branch
          %525 = sbr.rel (%p523) target = $region60
        $region59: #{tpu_custom_call.1} parent=19 // pred_region
          %s526 = sand.u32 %s32, 1
          %s527 = scalar_lea.sflag [#allocation13], %s526
          %s528 = sand.u32 %s288, 1
          %s529 = smul.addr %s528, 256
          %s530 = scalar_lea.vmem [#allocation14], %s529
          %s531 = smul.u32 16, %s40
          %533 = vsyncadd %s527, 0
          %s534 = smul.addr %s531, 2
          %s535 = smul.addr %s534, 8
          %s536 = scalar_lea.hbm %s9, %s535
          %s537 = sshll.u32 %s536, 4
          %s538 = int_to_ptr.hbm [resolvable:$true] %s537
          %s539 = sshll.u32 %s530, 4
          %s540 = int_to_ptr.vmem [resolvable:$true] %s539
          %545 = dma.hbm_to_vmem [thread:$0]  %s538, 4096, %s540, %s527, 256, 256, 16
        $region60: #{tpu_custom_call.1} parent=19 // pred_fallthru
          _
      $region20: #{tpu_custom_call.1} parent=5 // pred_fallthru
        _
      %p546 = scmp.le.s32.totalorder 1, %s32
      %p547 = scmp.lt.s32.totalorder %s32, 5
      %p548 = pnand %p546, %p547
      %p549 = pneg %p548
      // Predicated region
      $region61: #{tpu_custom_call.1} parent=5 // pred_check
        _
      $region62: #{tpu_custom_call.1} parent=5 // pred_check_branch
        %551 = sbr.rel (%p548) target = $region64
      $region63: #{tpu_custom_call.1} parent=5 // pred_region
        %s552 = ssub.s32 %s32, 1
        %s553 = sand.u32 %s57, 1
        %s554 = scalar_lea.sflag [#allocation4], %s553
        %s555 = sand.u32 %s57, 1
        %s556 = smul.addr %s555, 64
        %s557 = scalar_lea.vmem [#allocation3], %s556
        // Predicated region
        $region65: #{tpu_custom_call.1} parent=63 // pred_check
          %p558 = pneg %p70
        $region66: #{tpu_custom_call.1} parent=63 // pred_check_branch
          %560 = sbr.rel (%p558) target = $region68
        $region67: #{tpu_custom_call.1} parent=63 // pred_region
          %562 = dma.done %s554, 1024
        $region68: #{tpu_custom_call.1} parent=63 // pred_fallthru
          _
        %s563 = sand.u32 %s37, 1
        %s564 = scalar_lea.sflag [#allocation7], %s563
        %s565 = sand.u32 %s83, 1
        %s566 = smul.addr %s565, 128
        %s567 = scalar_lea.vmem [#allocation6], %s566
        // Predicated region
        $region69: #{tpu_custom_call.1} parent=63 // pred_check
          %p568 = pneg %p96
        $region70: #{tpu_custom_call.1} parent=63 // pred_check_branch
          %570 = sbr.rel (%p568) target = $region72
        $region71: #{tpu_custom_call.1} parent=63 // pred_region
          %572 = dma.done %s564, 2048
        $region72: #{tpu_custom_call.1} parent=63 // pred_fallthru
          _
        %s573 = sand.u32 %s37, 1
        %s574 = scalar_lea.sflag [#allocation7], %s573
        %s575 = sand.u32 %s109, 1
        %s576 = smul.addr %s575, 128
        %s577 = scalar_lea.vmem [#allocation8], %s576
        // Predicated region
        $region73: #{tpu_custom_call.1} parent=63 // pred_check
          %p578 = pneg %p122
        $region74: #{tpu_custom_call.1} parent=63 // pred_check_branch
          %580 = sbr.rel (%p578) target = $region76
        $region75: #{tpu_custom_call.1} parent=63 // pred_region
          %582 = dma.done %s574, 2048
        $region76: #{tpu_custom_call.1} parent=63 // pred_fallthru
          _
        %s583 = sand.u32 %s37, 1
        %s584 = scalar_lea.sflag [#allocation10], %s583
        %s585 = sand.u32 %s135, 1
        %s586 = smul.addr %s585, 256
        %s587 = scalar_lea.vmem [#allocation9], %s586
        // Predicated region
        $region77: #{tpu_custom_call.1} parent=63 // pred_check
          %p588 = pneg %p148
        $region78: #{tpu_custom_call.1} parent=63 // pred_check_branch
          %590 = sbr.rel (%p588) target = $region80
        $region79: #{tpu_custom_call.1} parent=63 // pred_region
          %592 = dma.done %s584, 4096
        $region80: #{tpu_custom_call.1} parent=63 // pred_fallthru
          _
        %s593 = sand.u32 %s37, 1
        %s594 = scalar_lea.sflag [#allocation10], %s593
        %s595 = sand.u32 %s187, 1
        %s596 = smul.addr %s595, 256
        %s597 = scalar_lea.vmem [#allocation11], %s596
        // Predicated region
        $region81: #{tpu_custom_call.1} parent=63 // pred_check
          %p598 = pneg %p200
        $region82: #{tpu_custom_call.1} parent=63 // pred_check_branch
          %600 = sbr.rel (%p598) target = $region84
        $region83: #{tpu_custom_call.1} parent=63 // pred_region
          %602 = dma.done %s594, 4096
        $region84: #{tpu_custom_call.1} parent=63 // pred_fallthru
          _
        %s603 = sand.u32 %s37, 1
        %s604 = scalar_lea.sflag [#allocation13], %s603
        %s605 = sand.u32 %s239, 1
        %s606 = smul.addr %s605, 256
        %s607 = scalar_lea.vmem [#allocation12], %s606
        // Predicated region
        $region85: #{tpu_custom_call.1} parent=63 // pred_check
          %p608 = pneg %p252
        $region86: #{tpu_custom_call.1} parent=63 // pred_check_branch
          %610 = sbr.rel (%p608) target = $region88
        $region87: #{tpu_custom_call.1} parent=63 // pred_region
          %612 = dma.done %s604, 4096
        $region88: #{tpu_custom_call.1} parent=63 // pred_fallthru
          _
        %s613 = sand.u32 %s37, 1
        %s614 = scalar_lea.sflag [#allocation13], %s613
        %s615 = sand.u32 %s291, 1
        %s616 = smul.addr %s615, 256
        %s617 = scalar_lea.vmem [#allocation14], %s616
        // Predicated region
        $region89: #{tpu_custom_call.1} parent=63 // pred_check
          %p618 = pneg %p304
        $region90: #{tpu_custom_call.1} parent=63 // pred_check_branch
          %620 = sbr.rel (%p618) target = $region92
        $region91: #{tpu_custom_call.1} parent=63 // pred_region
          %622 = dma.done %s614, 4096
        $region92: #{tpu_custom_call.1} parent=63 // pred_fallthru
          _
        %s623 = sand.u32 %s57, 1
        %s624 = scalar_lea.sflag [#allocation4], %s623
        %s625 = sand.u32 %s57, 1
        %s626 = smul.addr %s625, 64
        %s627 = scalar_lea.vmem [#allocation3], %s626
        %p628 = pneg %p70
        %p629 = pneg %p67
        %s630 = sand.u32 %s37, 1
        %s631 = scalar_lea.sflag [#allocation7], %s630
        %s632 = sand.u32 %s83, 1
        %s633 = smul.addr %s632, 128
        %s634 = scalar_lea.vmem [#allocation6], %s633
        %p635 = pneg %p96
        %p636 = pneg %p93
        %s637 = sand.u32 %s37, 1
        %s638 = scalar_lea.sflag [#allocation7], %s637
        %s639 = sand.u32 %s109, 1
        %s640 = smul.addr %s639, 128
        %s641 = scalar_lea.vmem [#allocation8], %s640
        %p642 = pneg %p122
        %p643 = pneg %p119
        %s644 = sand.u32 %s37, 1
        %s645 = scalar_lea.sflag [#allocation10], %s644
        %s646 = sand.u32 %s135, 1
        %s647 = smul.addr %s646, 256
        %s648 = scalar_lea.vmem [#allocation9], %s647
        %p649 = pneg %p148
        %p650 = pneg %p145
        %p651 = scmp.lt.s32.totalorder %s42, 1
        %s652 = scalar_select %p651, %s42, 1
        %s653 = scalar_lea.vmem %s4, %s652
        %p654 = pneg %p174
        %p655 = pneg %p171
        %s656 = sand.u32 %s37, 1
        %s657 = scalar_lea.sflag [#allocation10], %s656
        %s658 = sand.u32 %s187, 1
        %s659 = smul.addr %s658, 256
        %s660 = scalar_lea.vmem [#allocation11], %s659
        %p661 = pneg %p200
        %p662 = pneg %p197
        %p663 = scmp.lt.s32.totalorder %s42, 1
        %s664 = scalar_select %p663, %s42, 1
        %s665 = scalar_lea.vmem %s6, %s664
        %p666 = pneg %p226
        %p667 = pneg %p223
        %s668 = sand.u32 %s37, 1
        %s669 = scalar_lea.sflag [#allocation13], %s668
        %s670 = sand.u32 %s239, 1
        %s671 = smul.addr %s670, 256
        %s672 = scalar_lea.vmem [#allocation12], %s671
        %p673 = pneg %p252
        %p674 = pneg %p249
        %p675 = scmp.lt.s32.totalorder %s42, 1
        %s676 = scalar_select %p675, %s42, 1
        %s677 = scalar_lea.vmem %s8, %s676
        %p678 = pneg %p278
        %p679 = pneg %p275
        %s680 = sand.u32 %s37, 1
        %s681 = scalar_lea.sflag [#allocation13], %s680
        %s682 = sand.u32 %s291, 1
        %s683 = smul.addr %s682, 256
        %s684 = scalar_lea.vmem [#allocation14], %s683
        %p685 = pneg %p304
        %p686 = pneg %p301
        %p687 = pneg %p325
        %p688 = pneg %p322
        %p689 = pneg %p351
        %p690 = pneg %p348
        %s691 = sand.u32 %s338, 1
        %s692 = scalar_lea.sflag [#allocation5], %s691
        %s693 = sand.u32 %s338, 1
        %s694 = smul.addr %s693, 64
        %s695 = scalar_lea.vmem [#allocation15], %s694
        %s696 = smul.u32 2, %s41
        %s697 = smul.u32 2, %s41
        %s698 = smul.u32 2, %s41
        %p699 = scmp.lt.s32.totalorder %s42, 1
        %s700 = scalar_select %p699, %s42, 1
        %s701 = scalar_lea.vmem %s4, %s700
        %p702 = scmp.lt.s32.totalorder %s42, 1
        %s703 = scalar_select %p702, %s42, 1
        %s704 = scalar_lea.vmem %s6, %s703
        %p705 = scmp.lt.s32.totalorder %s42, 1
        %s706 = scalar_select %p705, %s42, 1
        %s707 = scalar_lea.vmem %s8, %s706
        %s708 = smul.u32 16, %s42
        %s709 = smul.u32 2, %s41
        %p710 = scmp.eq.s32.totalorder %s42, 0
        // Predicated region
        $region93: #{tpu_custom_call.1} parent=63 // pred_check
          %p711 = pneg %p710
        $region94: #{tpu_custom_call.1} parent=63 // pred_check_branch
          %713 = sbr.rel (%p711) target = $region96
        $region95: #{tpu_custom_call.1} parent=63 // pred_region
          %714 = vst [vmem:[#allocation2] sm:$0xff] 0.0
          %715 = vst [vmem:[#allocation2 + $0x8] sm:$0xff] 0.0
          %716 = vst [vmem:[#allocation2 + $0x10] sm:$0xff] 0.0
          %717 = vst [vmem:[#allocation2 + $0x18] sm:$0xff] 0.0
          %718 = vst [vmem:[#allocation2 + $0x20] sm:$0xff] 0.0
          %719 = vst [vmem:[#allocation2 + $0x28] sm:$0xff] 0.0
          %720 = vst [vmem:[#allocation2 + $0x30] sm:$0xff] 0.0
          %721 = vst [vmem:[#allocation2 + $0x38] sm:$0xff] 0.0
        $region96: #{tpu_custom_call.1} parent=63 // pred_fallthru
          _
        %v722 = vld [vmem:[%s557] sm:$0xff]
        %v723 = vld [vmem:[%s557 + $0x8] sm:$0xff]
        %v724 = vld [vmem:[%s557 + $0x10] sm:$0xff]
        %v725 = vld [vmem:[%s557 + $0x18] sm:$0xff]
        %v726 = vld [vmem:[%s557 + $0x20] sm:$0xff]
        %v727 = vld [vmem:[%s557 + $0x28] sm:$0xff]
        %v728 = vld [vmem:[%s557 + $0x30] sm:$0xff]
        %v729 = vld [vmem:[%s557 + $0x38] sm:$0xff]
        %v730 = vld [vmem:[%s567] sm:$0xff]
        %v731 = vld [vmem:[%s567 + $0x8] sm:$0xff]
        %v732 = vld [vmem:[%s567 + $0x10] sm:$0xff]
        %v733 = vld [vmem:[%s567 + $0x18] sm:$0xff]
        %v734 = vld [vmem:[%s567 + $0x20] sm:$0xff]
        %v735 = vld [vmem:[%s567 + $0x28] sm:$0xff]
        %v736 = vld [vmem:[%s567 + $0x30] sm:$0xff]
        %v737 = vld [vmem:[%s567 + $0x38] sm:$0xff]
        %v738 = vld [vmem:[%s567 + $0x40] sm:$0xff]
        %v739 = vld [vmem:[%s567 + $0x48] sm:$0xff]
        %v740 = vld [vmem:[%s567 + $0x50] sm:$0xff]
        %v741 = vld [vmem:[%s567 + $0x58] sm:$0xff]
        %v742 = vld [vmem:[%s567 + $0x60] sm:$0xff]
        %v743 = vld [vmem:[%s567 + $0x68] sm:$0xff]
        %v744 = vld [vmem:[%s567 + $0x70] sm:$0xff]
        %v745 = vld [vmem:[%s567 + $0x78] sm:$0xff]
        %v746 = vld [vmem:[%s577] sm:$0xff]
        %v747 = vld [vmem:[%s577 + $0x8] sm:$0xff]
        %v748 = vld [vmem:[%s577 + $0x10] sm:$0xff]
        %v749 = vld [vmem:[%s577 + $0x18] sm:$0xff]
        %v750 = vld [vmem:[%s577 + $0x20] sm:$0xff]
        %v751 = vld [vmem:[%s577 + $0x28] sm:$0xff]
        %v752 = vld [vmem:[%s577 + $0x30] sm:$0xff]
        %v753 = vld [vmem:[%s577 + $0x38] sm:$0xff]
        %v754 = vld [vmem:[%s577 + $0x40] sm:$0xff]
        %v755 = vld [vmem:[%s577 + $0x48] sm:$0xff]
        %v756 = vld [vmem:[%s577 + $0x50] sm:$0xff]
        %v757 = vld [vmem:[%s577 + $0x58] sm:$0xff]
        %v758 = vld [vmem:[%s577 + $0x60] sm:$0xff]
        %v759 = vld [vmem:[%s577 + $0x68] sm:$0xff]
        %v760 = vld [vmem:[%s577 + $0x70] sm:$0xff]
        %v761 = vld [vmem:[%s577 + $0x78] sm:$0xff]
        %v762 = vld [vmem:[%s587] sm:$0xff]
        %v763 = vld [vmem:[%s587 + $0x8] sm:$0xff]
        %v764 = vld [vmem:[%s587 + $0x10] sm:$0xff]
        %v765 = vld [vmem:[%s587 + $0x18] sm:$0xff]
        %v766 = vld [vmem:[%s587 + $0x20] sm:$0xff]
        %v767 = vld [vmem:[%s587 + $0x28] sm:$0xff]
        %v768 = vld [vmem:[%s587 + $0x30] sm:$0xff]
        %v769 = vld [vmem:[%s587 + $0x38] sm:$0xff]
        %v770 = vld [vmem:[%s587 + $0x40] sm:$0xff]
        %v771 = vld [vmem:[%s587 + $0x48] sm:$0xff]
        %v772 = vld [vmem:[%s587 + $0x50] sm:$0xff]
        %v773 = vld [vmem:[%s587 + $0x58] sm:$0xff]
        %v774 = vld [vmem:[%s587 + $0x60] sm:$0xff]
        %v775 = vld [vmem:[%s587 + $0x68] sm:$0xff]
        %v776 = vld [vmem:[%s587 + $0x70] sm:$0xff]
        %v777 = vld [vmem:[%s587 + $0x78] sm:$0xff]
        %v778 = vld [vmem:[%s587 + $0x80] sm:$0xff]
        %v779 = vld [vmem:[%s587 + $0x88] sm:$0xff]
        %v780 = vld [vmem:[%s587 + $0x90] sm:$0xff]
        %v781 = vld [vmem:[%s587 + $0x98] sm:$0xff]
        %v782 = vld [vmem:[%s587 + $0xa0] sm:$0xff]
        %v783 = vld [vmem:[%s587 + $0xa8] sm:$0xff]
        %v784 = vld [vmem:[%s587 + $0xb0] sm:$0xff]
        %v785 = vld [vmem:[%s587 + $0xb8] sm:$0xff]
        %v786 = vld [vmem:[%s587 + $0xc0] sm:$0xff]
        %v787 = vld [vmem:[%s587 + $0xc8] sm:$0xff]
        %v788 = vld [vmem:[%s587 + $0xd0] sm:$0xff]
        %v789 = vld [vmem:[%s587 + $0xd8] sm:$0xff]
        %v790 = vld [vmem:[%s587 + $0xe0] sm:$0xff]
        %v791 = vld [vmem:[%s587 + $0xe8] sm:$0xff]
        %v792 = vld [vmem:[%s587 + $0xf0] sm:$0xff]
        %v793 = vld [vmem:[%s587 + $0xf8] sm:$0xff]
        %v794 = vld [vmem:[%s701] sm:$0x1]
        %v796 = vperm.slane %v794, 0
        %798 = vmatpush.msra.mxu0 %v777
        %799 = vmatpush.msra.mxu0 %v776
        %800 = vmatpush.msra.mxu0 %v775
        %801 = vmatpush.msra.mxu0 %v774
        %802 = vmatpush.msra.mxu0 %v773
        %803 = vmatpush.msra.mxu0 %v772
        %804 = vmatpush.msra.mxu0 %v771
        %805 = vmatpush.msra.mxu0 %v770
        %806 = vmatpush.msra.mxu0 %v769
        %807 = vmatpush.msra.mxu0 %v768
        %808 = vmatpush.msra.mxu0 %v767
        %809 = vmatpush.msra.mxu0 %v766
        %810 = vmatpush.msra.mxu0 %v765
        %811 = vmatpush.msra.mxu0 %v764
        %812 = vmatpush.msra.mxu0 %v763
        %813 = vmatpush.msra.mxu0 %v762
        %814 = vmatmul.f32.gmra.mxu0 %v722
        %v815 = vpop.f32.mrf.mxu0
        %v816 = vadd.f32 %v796, %v815
        %817 = vmatmul.f32.gmra.mxu0 %v724
        %v818 = vpop.f32.mrf.mxu0
        %v819 = vadd.f32 %v796, %v818
        %820 = vmatmul.f32.gmra.mxu0 %v726
        %v821 = vpop.f32.mrf.mxu0
        %v822 = vadd.f32 %v796, %v821
        %823 = vmatmul.f32.gmra.mxu0 %v728
        %v824 = vpop.f32.mrf.mxu0
        %v825 = vadd.f32 %v796, %v824
        %826 = vdwg.mxu0
        %827 = vmatpush.msra.mxu0 %v793
        %828 = vmatpush.msra.mxu0 %v792
        %829 = vmatpush.msra.mxu0 %v791
        %830 = vmatpush.msra.mxu0 %v790
        %831 = vmatpush.msra.mxu0 %v789
        %832 = vmatpush.msra.mxu0 %v788
        %833 = vmatpush.msra.mxu0 %v787
        %834 = vmatpush.msra.mxu0 %v786
        %835 = vmatpush.msra.mxu0 %v785
        %836 = vmatpush.msra.mxu0 %v784
        %837 = vmatpush.msra.mxu0 %v783
        %838 = vmatpush.msra.mxu0 %v782
        %839 = vmatpush.msra.mxu0 %v781
        %840 = vmatpush.msra.mxu0 %v780
        %841 = vmatpush.msra.mxu0 %v779
        %842 = vmatpush.msra.mxu0 %v778
        %843 = vmatmul.f32.gmra.mxu0 %v723
        %v844 = vpop.f32.mrf.mxu0
        %v845 = vadd.f32 %v816, %v844
        %846 = vmatmul.f32.gmra.mxu0 %v725
        %v847 = vpop.f32.mrf.mxu0
        %v848 = vadd.f32 %v819, %v847
        %849 = vmatmul.f32.gmra.mxu0 %v727
        %v850 = vpop.f32.mrf.mxu0
        %v851 = vadd.f32 %v822, %v850
        %852 = vmatmul.f32.gmra.mxu0 %v729
        %v853 = vpop.f32.mrf.mxu0
        %v854 = vadd.f32 %v825, %v853
        %855 = vdwg.mxu0
        %v856 = vmul.f32 %v845, 0.088388346
        %v857 = vmul.f32 %v848, 0.088388346
        %v858 = vmul.f32 %v851, 0.088388346
        %v859 = vmul.f32 %v854, 0.088388346
        %v860 = vld [vmem:[%s597] sm:$0xff]
        %v861 = vld [vmem:[%s597 + $0x8] sm:$0xff]
        %v862 = vld [vmem:[%s597 + $0x10] sm:$0xff]
        %v863 = vld [vmem:[%s597 + $0x18] sm:$0xff]
        %v864 = vld [vmem:[%s597 + $0x20] sm:$0xff]
        %v865 = vld [vmem:[%s597 + $0x28] sm:$0xff]
        %v866 = vld [vmem:[%s597 + $0x30] sm:$0xff]
        %v867 = vld [vmem:[%s597 + $0x38] sm:$0xff]
        %v868 = vld [vmem:[%s597 + $0x40] sm:$0xff]
        %v869 = vld [vmem:[%s597 + $0x48] sm:$0xff]
        %v870 = vld [vmem:[%s597 + $0x50] sm:$0xff]
        %v871 = vld [vmem:[%s597 + $0x58] sm:$0xff]
        %v872 = vld [vmem:[%s597 + $0x60] sm:$0xff]
        %v873 = vld [vmem:[%s597 + $0x68] sm:$0xff]
        %v874 = vld [vmem:[%s597 + $0x70] sm:$0xff]
        %v875 = vld [vmem:[%s597 + $0x78] sm:$0xff]
        %v876 = vld [vmem:[%s597 + $0x80] sm:$0xff]
        %v877 = vld [vmem:[%s597 + $0x88] sm:$0xff]
        %v878 = vld [vmem:[%s597 + $0x90] sm:$0xff]
        %v879 = vld [vmem:[%s597 + $0x98] sm:$0xff]
        %v880 = vld [vmem:[%s597 + $0xa0] sm:$0xff]
        %v881 = vld [vmem:[%s597 + $0xa8] sm:$0xff]
        %v882 = vld [vmem:[%s597 + $0xb0] sm:$0xff]
        %v883 = vld [vmem:[%s597 + $0xb8] sm:$0xff]
        %v884 = vld [vmem:[%s597 + $0xc0] sm:$0xff]
        %v885 = vld [vmem:[%s597 + $0xc8] sm:$0xff]
        %v886 = vld [vmem:[%s597 + $0xd0] sm:$0xff]
        %v887 = vld [vmem:[%s597 + $0xd8] sm:$0xff]
        %v888 = vld [vmem:[%s597 + $0xe0] sm:$0xff]
        %v889 = vld [vmem:[%s597 + $0xe8] sm:$0xff]
        %v890 = vld [vmem:[%s597 + $0xf0] sm:$0xff]
        %v891 = vld [vmem:[%s597 + $0xf8] sm:$0xff]
        %v892 = vld [vmem:[%s704] sm:$0x1]
        %v894 = vperm.slane %v892, 0
        %896 = vmatpush.msra.mxu0 %v875
        %897 = vmatpush.msra.mxu0 %v874
        %898 = vmatpush.msra.mxu0 %v873
        %899 = vmatpush.msra.mxu0 %v872
        %900 = vmatpush.msra.mxu0 %v871
        %901 = vmatpush.msra.mxu0 %v870
        %902 = vmatpush.msra.mxu0 %v869
        %903 = vmatpush.msra.mxu0 %v868
        %904 = vmatpush.msra.mxu0 %v867
        %905 = vmatpush.msra.mxu0 %v866
        %906 = vmatpush.msra.mxu0 %v865
        %907 = vmatpush.msra.mxu0 %v864
        %908 = vmatpush.msra.mxu0 %v863
        %909 = vmatpush.msra.mxu0 %v862
        %910 = vmatpush.msra.mxu0 %v861
        %911 = vmatpush.msra.mxu0 %v860
        %912 = vmatmul.f32.gmra.mxu0 %v730
        %v913 = vpop.f32.mrf.mxu0
        %v914 = vadd.f32 %v894, %v913
        %915 = vmatmul.f32.gmra.mxu0 %v732
        %v916 = vpop.f32.mrf.mxu0
        %v917 = vadd.f32 %v894, %v916
        %918 = vmatmul.f32.gmra.mxu0 %v734
        %v919 = vpop.f32.mrf.mxu0
        %v920 = vadd.f32 %v894, %v919
        %921 = vmatmul.f32.gmra.mxu0 %v736
        %v922 = vpop.f32.mrf.mxu0
        %v923 = vadd.f32 %v894, %v922
        %924 = vmatmul.f32.gmra.mxu0 %v738
        %v925 = vpop.f32.mrf.mxu0
        %v926 = vadd.f32 %v894, %v925
        %927 = vmatmul.f32.gmra.mxu0 %v740
        %v928 = vpop.f32.mrf.mxu0
        %v929 = vadd.f32 %v894, %v928
        %930 = vmatmul.f32.gmra.mxu0 %v742
        %v931 = vpop.f32.mrf.mxu0
        %v932 = vadd.f32 %v894, %v931
        %933 = vmatmul.f32.gmra.mxu0 %v744
        %v934 = vpop.f32.mrf.mxu0
        %v935 = vadd.f32 %v894, %v934
        %936 = vdwg.mxu0
        %937 = vmatpush.msra.mxu0 %v891
        %938 = vmatpush.msra.mxu0 %v890
        %939 = vmatpush.msra.mxu0 %v889
        %940 = vmatpush.msra.mxu0 %v888
        %941 = vmatpush.msra.mxu0 %v887
        %942 = vmatpush.msra.mxu0 %v886
        %943 = vmatpush.msra.mxu0 %v885
        %944 = vmatpush.msra.mxu0 %v884
        %945 = vmatpush.msra.mxu0 %v883
        %946 = vmatpush.msra.mxu0 %v882
        %947 = vmatpush.msra.mxu0 %v881
        %948 = vmatpush.msra.mxu0 %v880
        %949 = vmatpush.msra.mxu0 %v879
        %950 = vmatpush.msra.mxu0 %v878
        %951 = vmatpush.msra.mxu0 %v877
        %952 = vmatpush.msra.mxu0 %v876
        %953 = vmatmul.f32.gmra.mxu0 %v731
        %v954 = vpop.f32.mrf.mxu0
        %v955 = vadd.f32 %v914, %v954
        %956 = vmatmul.f32.gmra.mxu0 %v733
        %v957 = vpop.f32.mrf.mxu0
        %v958 = vadd.f32 %v917, %v957
        %959 = vmatmul.f32.gmra.mxu0 %v735
        %v960 = vpop.f32.mrf.mxu0
        %v961 = vadd.f32 %v920, %v960
        %962 = vmatmul.f32.gmra.mxu0 %v737
        %v963 = vpop.f32.mrf.mxu0
        %v964 = vadd.f32 %v923, %v963
        %965 = vmatmul.f32.gmra.mxu0 %v739
        %v966 = vpop.f32.mrf.mxu0
        %v967 = vadd.f32 %v926, %v966
        %968 = vmatmul.f32.gmra.mxu0 %v741
        %v969 = vpop.f32.mrf.mxu0
        %v970 = vadd.f32 %v929, %v969
        %971 = vmatmul.f32.gmra.mxu0 %v743
        %v972 = vpop.f32.mrf.mxu0
        %v973 = vadd.f32 %v932, %v972
        %974 = vmatmul.f32.gmra.mxu0 %v745
        %v975 = vpop.f32.mrf.mxu0
        %v976 = vadd.f32 %v935, %v975
        %977 = vdwg.mxu0
        %v978 = vld [vmem:[%s607] sm:$0xff]
        %v979 = vld [vmem:[%s607 + $0x8] sm:$0xff]
        %v980 = vld [vmem:[%s607 + $0x10] sm:$0xff]
        %v981 = vld [vmem:[%s607 + $0x18] sm:$0xff]
        %v982 = vld [vmem:[%s607 + $0x20] sm:$0xff]
        %v983 = vld [vmem:[%s607 + $0x28] sm:$0xff]
        %v984 = vld [vmem:[%s607 + $0x30] sm:$0xff]
        %v985 = vld [vmem:[%s607 + $0x38] sm:$0xff]
        %v986 = vld [vmem:[%s607 + $0x40] sm:$0xff]
        %v987 = vld [vmem:[%s607 + $0x48] sm:$0xff]
        %v988 = vld [vmem:[%s607 + $0x50] sm:$0xff]
        %v989 = vld [vmem:[%s607 + $0x58] sm:$0xff]
        %v990 = vld [vmem:[%s607 + $0x60] sm:$0xff]
        %v991 = vld [vmem:[%s607 + $0x68] sm:$0xff]
        %v992 = vld [vmem:[%s607 + $0x70] sm:$0xff]
        %v993 = vld [vmem:[%s607 + $0x78] sm:$0xff]
        %v994 = vld [vmem:[%s607 + $0x80] sm:$0xff]
        %v995 = vld [vmem:[%s607 + $0x88] sm:$0xff]
        %v996 = vld [vmem:[%s607 + $0x90] sm:$0xff]
        %v997 = vld [vmem:[%s607 + $0x98] sm:$0xff]
        %v998 = vld [vmem:[%s607 + $0xa0] sm:$0xff]
        %v999 = vld [vmem:[%s607 + $0xa8] sm:$0xff]
        %v1000 = vld [vmem:[%s607 + $0xb0] sm:$0xff]
        %v1001 = vld [vmem:[%s607 + $0xb8] sm:$0xff]
        %v1002 = vld [vmem:[%s607 + $0xc0] sm:$0xff]
        %v1003 = vld [vmem:[%s607 + $0xc8] sm:$0xff]
        %v1004 = vld [vmem:[%s607 + $0xd0] sm:$0xff]
        %v1005 = vld [vmem:[%s607 + $0xd8] sm:$0xff]
        %v1006 = vld [vmem:[%s607 + $0xe0] sm:$0xff]
        %v1007 = vld [vmem:[%s607 + $0xe8] sm:$0xff]
        %v1008 = vld [vmem:[%s607 + $0xf0] sm:$0xff]
        %v1009 = vld [vmem:[%s607 + $0xf8] sm:$0xff]
        %v1010 = vld [vmem:[%s707] sm:$0x1]
        %v1012 = vperm.slane %v1010, 0
        %1014 = vmatpush.msra.mxu0 %v993
        %1015 = vmatpush.msra.mxu0 %v992
        %1016 = vmatpush.msra.mxu0 %v991
        %1017 = vmatpush.msra.mxu0 %v990
        %1018 = vmatpush.msra.mxu0 %v989
        %1019 = vmatpush.msra.mxu0 %v988
        %1020 = vmatpush.msra.mxu0 %v987
        %1021 = vmatpush.msra.mxu0 %v986
        %1022 = vmatpush.msra.mxu0 %v985
        %1023 = vmatpush.msra.mxu0 %v984
        %1024 = vmatpush.msra.mxu0 %v983
        %1025 = vmatpush.msra.mxu0 %v982
        %1026 = vmatpush.msra.mxu0 %v981
        %1027 = vmatpush.msra.mxu0 %v980
        %1028 = vmatpush.msra.mxu0 %v979
        %1029 = vmatpush.msra.mxu0 %v978
        %1030 = vmatmul.f32.gmra.mxu0 %v746
        %v1031 = vpop.f32.mrf.mxu0
        %v1032 = vadd.f32 %v1012, %v1031
        %1033 = vmatmul.f32.gmra.mxu0 %v748
        %v1034 = vpop.f32.mrf.mxu0
        %v1035 = vadd.f32 %v1012, %v1034
        %1036 = vmatmul.f32.gmra.mxu0 %v750
        %v1037 = vpop.f32.mrf.mxu0
        %v1038 = vadd.f32 %v1012, %v1037
        %1039 = vmatmul.f32.gmra.mxu0 %v752
        %v1040 = vpop.f32.mrf.mxu0
        %v1041 = vadd.f32 %v1012, %v1040
        %1042 = vmatmul.f32.gmra.mxu0 %v754
        %v1043 = vpop.f32.mrf.mxu0
        %v1044 = vadd.f32 %v1012, %v1043
        %1045 = vmatmul.f32.gmra.mxu0 %v756
        %v1046 = vpop.f32.mrf.mxu0
        %v1047 = vadd.f32 %v1012, %v1046
        %1048 = vmatmul.f32.gmra.mxu0 %v758
        %v1049 = vpop.f32.mrf.mxu0
        %v1050 = vadd.f32 %v1012, %v1049
        %1051 = vmatmul.f32.gmra.mxu0 %v760
        %v1052 = vpop.f32.mrf.mxu0
        %v1053 = vadd.f32 %v1012, %v1052
        %1054 = vdwg.mxu0
        %1055 = vmatpush.msra.mxu0 %v1009
        %1056 = vmatpush.msra.mxu0 %v1008
        %1057 = vmatpush.msra.mxu0 %v1007
        %1058 = vmatpush.msra.mxu0 %v1006
        %1059 = vmatpush.msra.mxu0 %v1005
        %1060 = vmatpush.msra.mxu0 %v1004
        %1061 = vmatpush.msra.mxu0 %v1003
        %1062 = vmatpush.msra.mxu0 %v1002
        %1063 = vmatpush.msra.mxu0 %v1001
        %1064 = vmatpush.msra.mxu0 %v1000
        %1065 = vmatpush.msra.mxu0 %v999
        %1066 = vmatpush.msra.mxu0 %v998
        %1067 = vmatpush.msra.mxu0 %v997
        %1068 = vmatpush.msra.mxu0 %v996
        %1069 = vmatpush.msra.mxu0 %v995
        %1070 = vmatpush.msra.mxu0 %v994
        %1071 = vmatmul.f32.gmra.mxu0 %v747
        %v1072 = vpop.f32.mrf.mxu0
        %v1073 = vadd.f32 %v1032, %v1072
        %1074 = vmatmul.f32.gmra.mxu0 %v749
        %v1075 = vpop.f32.mrf.mxu0
        %v1076 = vadd.f32 %v1035, %v1075
        %1077 = vmatmul.f32.gmra.mxu0 %v751
        %v1078 = vpop.f32.mrf.mxu0
        %v1079 = vadd.f32 %v1038, %v1078
        %1080 = vmatmul.f32.gmra.mxu0 %v753
        %v1081 = vpop.f32.mrf.mxu0
        %v1082 = vadd.f32 %v1041, %v1081
        %1083 = vmatmul.f32.gmra.mxu0 %v755
        %v1084 = vpop.f32.mrf.mxu0
        %v1085 = vadd.f32 %v1044, %v1084
        %1086 = vmatmul.f32.gmra.mxu0 %v757
        %v1087 = vpop.f32.mrf.mxu0
        %v1088 = vadd.f32 %v1047, %v1087
        %1089 = vmatmul.f32.gmra.mxu0 %v759
        %v1090 = vpop.f32.mrf.mxu0
        %v1091 = vadd.f32 %v1050, %v1090
        %1092 = vmatmul.f32.gmra.mxu0 %v761
        %v1093 = vpop.f32.mrf.mxu0
        %v1094 = vadd.f32 %v1053, %v1093
        %1095 = vdwg.mxu0
        %1096 = vmatpush.xpose.msra.mxu0 0.0
        %1097 = vmatpush.xpose.msra.mxu0 0.0
        %1098 = vmatpush.xpose.msra.mxu0 0.0
        %1099 = vmatpush.xpose.msra.mxu0 0.0
        %1100 = vmatpush.xpose.msra.mxu0 0.0
        %1101 = vmatpush.xpose.msra.mxu0 0.0
        %1102 = vmatpush.xpose.msra.mxu0 0.0
        %1103 = vmatpush.xpose.msra.mxu0 0.0
        %1104 = vmatpush.xpose.msra.mxu0 0.0
        %1105 = vmatpush.xpose.msra.mxu0 0.0
        %1106 = vmatpush.xpose.msra.mxu0 0.0
        %1107 = vmatpush.xpose.msra.mxu0 0.0
        %1108 = vmatpush.xpose.msra.mxu0 %v964
        %1109 = vmatpush.xpose.msra.mxu0 %v961
        %1110 = vmatpush.xpose.msra.mxu0 %v958
        %1111 = vmatpush.xpose.msra.mxu0 %v955
        %1112 = vmatmul.f32.gmra.mxu0 %v856
        %v1113 = vpop.f32.mrf.mxu0
        %v1114 = vadd.f32 0.0, %v1113
        %1115 = vmatmul.f32.gmra.mxu0 %v857
        %v1116 = vpop.f32.mrf.mxu0
        %v1117 = vadd.f32 0.0, %v1116
        %1118 = vdwg.mxu0
        %1119 = vmatpush.xpose.msra.mxu0 0.0
        %1120 = vmatpush.xpose.msra.mxu0 0.0
        %1121 = vmatpush.xpose.msra.mxu0 0.0
        %1122 = vmatpush.xpose.msra.mxu0 0.0
        %1123 = vmatpush.xpose.msra.mxu0 0.0
        %1124 = vmatpush.xpose.msra.mxu0 0.0
        %1125 = vmatpush.xpose.msra.mxu0 0.0
        %1126 = vmatpush.xpose.msra.mxu0 0.0
        %1127 = vmatpush.xpose.msra.mxu0 0.0
        %1128 = vmatpush.xpose.msra.mxu0 0.0
        %1129 = vmatpush.xpose.msra.mxu0 0.0
        %1130 = vmatpush.xpose.msra.mxu0 0.0
        %1131 = vmatpush.xpose.msra.mxu0 %v976
        %1132 = vmatpush.xpose.msra.mxu0 %v973
        %1133 = vmatpush.xpose.msra.mxu0 %v970
        %1134 = vmatpush.xpose.msra.mxu0 %v967
        %1135 = vmatmul.f32.gmra.mxu0 %v858
        %v1136 = vpop.f32.mrf.mxu0
        %v1137 = vadd.f32 0.0, %v1136
        %1138 = vmatmul.f32.gmra.mxu0 %v859
        %v1139 = vpop.f32.mrf.mxu0
        %v1140 = vadd.f32 0.0, %v1139
        %1141 = vdwg.mxu0
        %vm1142 = vcmask 261120
        %v1143 = vsel %vm1142, %v1114, -inf
        %1144 = vmax.xlane.f32.xlu0 %v1143
        %v1145 = vpop.xlane.xlu0 %1144
        %v1146 = vsel %vm1142, %v1117, -inf
        %1147 = vmax.xlane.f32.xlu0 %v1146
        %v1148 = vpop.xlane.xlu0 %1147
        %v1149 = vsel %vm1142, %v1137, -inf
        %1150 = vmax.xlane.f32.xlu0 %v1149
        %v1151 = vpop.xlane.xlu0 %1150
        %v1152 = vsel %vm1142, %v1140, -inf
        %1153 = vmax.xlane.f32.xlu0 %v1152
        %v1154 = vpop.xlane.xlu0 %1153
        %v1155 = vsub.f32 %v1114, %v1145
        %v1156 = vsub.f32 %v1117, %v1148
        %v1157 = vsub.f32 %v1137, %v1151
        %v1158 = vsub.f32 %v1140, %v1154
        %v1159 = vmul.f32 %v1155, 1.442695
        %v1160 = vpow.pop %v1159
        %v1161 = vmul.f32 %v1156, 1.442695
        %v1162 = vpow.pop %v1161
        %v1163 = vmul.f32 %v1157, 1.442695
        %v1164 = vpow.pop %v1163
        %v1165 = vmul.f32 %v1158, 1.442695
        %v1166 = vpow.pop %v1165
        %v1167 = vsel %vm1142, %v1160, 0.0
        %1168 = vadd.xlane.f32.xlu0 %v1167
        %v1169 = vpop.xlane.xlu0 %1168
        %v1170 = vsel %vm1142, %v1162, 0.0
        %1171 = vadd.xlane.f32.xlu0 %v1170
        %v1172 = vpop.xlane.xlu0 %1171
        %v1173 = vsel %vm1142, %v1164, 0.0
        %1174 = vadd.xlane.f32.xlu0 %v1173
        %v1175 = vpop.xlane.xlu0 %1174
        %v1176 = vsel %vm1142, %v1166, 0.0
        %1177 = vadd.xlane.f32.xlu0 %v1176
        %v1178 = vpop.xlane.xlu0 %1177
        %v1179 = vrcp.pop %v1169
        %v1180 = vmul.f32 %v1169, %v1179
        %v1181 = vsub.f32 1.0, %v1180
        %v1182 = vmul.f32 %v1179, %v1181
        %v1183 = vadd.f32 %v1179, %v1182
        %vm1184 = vweird.f32 %v1169
        %vm1185 = vweird.f32 %v1179
        %vm1186 = vmor %vm1184, %vm1185
        %v1187 = vsel %vm1186, %v1179, %v1183
        %v1188 = vand.u32 2147483647, %v1169
        %vm1189 = vcmp.eq.f32.partialorder %v1188, 8.507059e+37
        %v1190 = vand.u32 %v1169, 2147483648
        %v1191 = vor.u32 1.1754944e-38, %v1190
        %v1192 = vsel %vm1189, %v1191, %v1187
        %v1193 = vmul.f32 %v1160, %v1192
        %v1194 = vrcp.pop %v1172
        %v1195 = vmul.f32 %v1172, %v1194
        %v1196 = vsub.f32 1.0, %v1195
        %v1197 = vmul.f32 %v1194, %v1196
        %v1198 = vadd.f32 %v1194, %v1197
        %vm1199 = vweird.f32 %v1172
        %vm1200 = vweird.f32 %v1194
        %vm1201 = vmor %vm1199, %vm1200
        %v1202 = vsel %vm1201, %v1194, %v1198
        %v1203 = vand.u32 2147483647, %v1172
        %vm1204 = vcmp.eq.f32.partialorder %v1203, 8.507059e+37
        %v1205 = vand.u32 %v1172, 2147483648
        %v1206 = vor.u32 1.1754944e-38, %v1205
        %v1207 = vsel %vm1204, %v1206, %v1202
        %v1208 = vmul.f32 %v1162, %v1207
        %v1209 = vrcp.pop %v1175
        %v1210 = vmul.f32 %v1175, %v1209
        %v1211 = vsub.f32 1.0, %v1210
        %v1212 = vmul.f32 %v1209, %v1211
        %v1213 = vadd.f32 %v1209, %v1212
        %vm1214 = vweird.f32 %v1175
        %vm1215 = vweird.f32 %v1209
        %vm1216 = vmor %vm1214, %vm1215
        %v1217 = vsel %vm1216, %v1209, %v1213
        %v1218 = vand.u32 2147483647, %v1175
        %vm1219 = vcmp.eq.f32.partialorder %v1218, 8.507059e+37
        %v1220 = vand.u32 %v1175, 2147483648
        %v1221 = vor.u32 1.1754944e-38, %v1220
        %v1222 = vsel %vm1219, %v1221, %v1217
        %v1223 = vmul.f32 %v1164, %v1222
        %v1224 = vrcp.pop %v1178
        %v1225 = vmul.f32 %v1178, %v1224
        %v1226 = vsub.f32 1.0, %v1225
        %v1227 = vmul.f32 %v1224, %v1226
        %v1228 = vadd.f32 %v1224, %v1227
        %vm1229 = vweird.f32 %v1178
        %vm1230 = vweird.f32 %v1224
        %vm1231 = vmor %vm1229, %vm1230
        %v1232 = vsel %vm1231, %v1224, %v1228
        %v1233 = vand.u32 2147483647, %v1178
        %vm1234 = vcmp.eq.f32.partialorder %v1233, 8.507059e+37
        %v1235 = vand.u32 %v1178, 2147483648
        %v1236 = vor.u32 1.1754944e-38, %v1235
        %v1237 = vsel %vm1234, %v1236, %v1232
        %v1238 = vmul.f32 %v1166, %v1237
        %v1240 = vsel %vm1142, %v1193, 0
        %v1243 = vsel %vm1142, %v1208, 0
        %1245 = vmatpush.msra.mxu0 0.0
        %1246 = vmatpush.msra.mxu0 0.0
        %1247 = vmatpush.msra.mxu0 0.0
        %1248 = vmatpush.msra.mxu0 0.0
        %1249 = vmatpush.msra.mxu0 0.0
        %1250 = vmatpush.msra.mxu0 0.0
        %1251 = vmatpush.msra.mxu0 0.0
        %1252 = vmatpush.msra.mxu0 0.0
        %1253 = vmatpush.msra.mxu0 0.0
        %1254 = vmatpush.msra.mxu0 0.0
        %1255 = vmatpush.msra.mxu0 0.0
        %1256 = vmatpush.msra.mxu0 0.0
        %1257 = vmatpush.msra.mxu0 %v1082
        %1258 = vmatpush.msra.mxu0 %v1079
        %1259 = vmatpush.msra.mxu0 %v1076
        %1260 = vmatpush.msra.mxu0 %v1073
        %1261 = vmatmul.f32.gmra.mxu0 %v1240
        %v1262 = vpop.f32.mrf.mxu0
        %v1263 = vadd.f32 0.0, %v1262
        %1264 = vmatmul.f32.gmra.mxu0 %v1243
        %v1265 = vpop.f32.mrf.mxu0
        %v1266 = vadd.f32 0.0, %v1265
        %1267 = vdwg.mxu0
        %v1269 = vsel %vm1142, %v1223, 0
        %v1272 = vsel %vm1142, %v1238, 0
        %1274 = vmatpush.msra.mxu0 0.0
        %1275 = vmatpush.msra.mxu0 0.0
        %1276 = vmatpush.msra.mxu0 0.0
        %1277 = vmatpush.msra.mxu0 0.0
        %1278 = vmatpush.msra.mxu0 0.0
        %1279 = vmatpush.msra.mxu0 0.0
        %1280 = vmatpush.msra.mxu0 0.0
        %1281 = vmatpush.msra.mxu0 0.0
        %1282 = vmatpush.msra.mxu0 0.0
        %1283 = vmatpush.msra.mxu0 0.0
        %1284 = vmatpush.msra.mxu0 0.0
        %1285 = vmatpush.msra.mxu0 0.0
        %1286 = vmatpush.msra.mxu0 %v1094
        %1287 = vmatpush.msra.mxu0 %v1091
        %1288 = vmatpush.msra.mxu0 %v1088
        %1289 = vmatpush.msra.mxu0 %v1085
        %1290 = vmatmul.f32.gmra.mxu0 %v1269
        %v1291 = vpop.f32.mrf.mxu0
        %v1292 = vadd.f32 0.0, %v1291
        %1293 = vmatmul.f32.gmra.mxu0 %v1272
        %v1294 = vpop.f32.mrf.mxu0
        %v1295 = vadd.f32 0.0, %v1294
        %1296 = vdwg.mxu0
        %v1297 = vld [vmem:[#allocation2] sm:$0xff]
        %v1298 = vld [vmem:[#allocation2 + $0x8] sm:$0xff]
        %v1299 = vld [vmem:[#allocation2 + $0x10] sm:$0xff]
        %v1300 = vld [vmem:[#allocation2 + $0x18] sm:$0xff]
        %v1301 = vld [vmem:[#allocation2 + $0x20] sm:$0xff]
        %v1302 = vld [vmem:[#allocation2 + $0x28] sm:$0xff]
        %v1303 = vld [vmem:[#allocation2 + $0x30] sm:$0xff]
        %v1304 = vld [vmem:[#allocation2 + $0x38] sm:$0xff]
        %v1305 = vld [vmem:[%s617] sm:$0xff]
        %v1306 = vld [vmem:[%s617 + $0x8] sm:$0xff]
        %v1307 = vld [vmem:[%s617 + $0x10] sm:$0xff]
        %v1308 = vld [vmem:[%s617 + $0x18] sm:$0xff]
        %v1309 = vld [vmem:[%s617 + $0x20] sm:$0xff]
        %v1310 = vld [vmem:[%s617 + $0x28] sm:$0xff]
        %v1311 = vld [vmem:[%s617 + $0x30] sm:$0xff]
        %v1312 = vld [vmem:[%s617 + $0x38] sm:$0xff]
        %v1313 = vld [vmem:[%s617 + $0x40] sm:$0xff]
        %v1314 = vld [vmem:[%s617 + $0x48] sm:$0xff]
        %v1315 = vld [vmem:[%s617 + $0x50] sm:$0xff]
        %v1316 = vld [vmem:[%s617 + $0x58] sm:$0xff]
        %v1317 = vld [vmem:[%s617 + $0x60] sm:$0xff]
        %v1318 = vld [vmem:[%s617 + $0x68] sm:$0xff]
        %v1319 = vld [vmem:[%s617 + $0x70] sm:$0xff]
        %v1320 = vld [vmem:[%s617 + $0x78] sm:$0xff]
        %v1321 = vld [vmem:[%s617 + $0x80] sm:$0xff]
        %v1322 = vld [vmem:[%s617 + $0x88] sm:$0xff]
        %v1323 = vld [vmem:[%s617 + $0x90] sm:$0xff]
        %v1324 = vld [vmem:[%s617 + $0x98] sm:$0xff]
        %v1325 = vld [vmem:[%s617 + $0xa0] sm:$0xff]
        %v1326 = vld [vmem:[%s617 + $0xa8] sm:$0xff]
        %v1327 = vld [vmem:[%s617 + $0xb0] sm:$0xff]
        %v1328 = vld [vmem:[%s617 + $0xb8] sm:$0xff]
        %v1329 = vld [vmem:[%s617 + $0xc0] sm:$0xff]
        %v1330 = vld [vmem:[%s617 + $0xc8] sm:$0xff]
        %v1331 = vld [vmem:[%s617 + $0xd0] sm:$0xff]
        %v1332 = vld [vmem:[%s617 + $0xd8] sm:$0xff]
        %v1333 = vld [vmem:[%s617 + $0xe0] sm:$0xff]
        %v1334 = vld [vmem:[%s617 + $0xe8] sm:$0xff]
        %v1335 = vld [vmem:[%s617 + $0xf0] sm:$0xff]
        %v1336 = vld [vmem:[%s617 + $0xf8] sm:$0xff]
        %1337 = vmatpush.msra.mxu0 %v1335
        %1338 = vmatpush.msra.mxu0 %v1333
        %1339 = vmatpush.msra.mxu0 %v1331
        %1340 = vmatpush.msra.mxu0 %v1329
        %1341 = vmatpush.msra.mxu0 %v1327
        %1342 = vmatpush.msra.mxu0 %v1325
        %1343 = vmatpush.msra.mxu0 %v1323
        %1344 = vmatpush.msra.mxu0 %v1321
        %1345 = vmatpush.msra.mxu0 %v1319
        %1346 = vmatpush.msra.mxu0 %v1317
        %1347 = vmatpush.msra.mxu0 %v1315
        %1348 = vmatpush.msra.mxu0 %v1313
        %1349 = vmatpush.msra.mxu0 %v1311
        %1350 = vmatpush.msra.mxu0 %v1309
        %1351 = vmatpush.msra.mxu0 %v1307
        %1352 = vmatpush.msra.mxu0 %v1305
        %1353 = vmatmul.f32.gmra.mxu0 %v1263
        %v1354 = vpop.f32.mrf.mxu0
        %v1355 = vadd.f32 0.0, %v1354
        %1356 = vmatmul.f32.gmra.mxu0 %v1266
        %v1357 = vpop.f32.mrf.mxu0
        %v1358 = vadd.f32 0.0, %v1357
        %1359 = vmatmul.f32.gmra.mxu0 %v1292
        %v1360 = vpop.f32.mrf.mxu0
        %v1361 = vadd.f32 0.0, %v1360
        %1362 = vmatmul.f32.gmra.mxu0 %v1295
        %v1363 = vpop.f32.mrf.mxu0
        %v1364 = vadd.f32 0.0, %v1363
        %1365 = vdwg.mxu0
        %1366 = vmatpush.msra.mxu0 %v1336
        %1367 = vmatpush.msra.mxu0 %v1334
        %1368 = vmatpush.msra.mxu0 %v1332
        %1369 = vmatpush.msra.mxu0 %v1330
        %1370 = vmatpush.msra.mxu0 %v1328
        %1371 = vmatpush.msra.mxu0 %v1326
        %1372 = vmatpush.msra.mxu0 %v1324
        %1373 = vmatpush.msra.mxu0 %v1322
        %1374 = vmatpush.msra.mxu0 %v1320
        %1375 = vmatpush.msra.mxu0 %v1318
        %1376 = vmatpush.msra.mxu0 %v1316
        %1377 = vmatpush.msra.mxu0 %v1314
        %1378 = vmatpush.msra.mxu0 %v1312
        %1379 = vmatpush.msra.mxu0 %v1310
        %1380 = vmatpush.msra.mxu0 %v1308
        %1381 = vmatpush.msra.mxu0 %v1306
        %1382 = vmatmul.f32.gmra.mxu0 %v1263
        %v1383 = vpop.f32.mrf.mxu0
        %v1384 = vadd.f32 0.0, %v1383
        %1385 = vmatmul.f32.gmra.mxu0 %v1266
        %v1386 = vpop.f32.mrf.mxu0
        %v1387 = vadd.f32 0.0, %v1386
        %1388 = vmatmul.f32.gmra.mxu0 %v1292
        %v1389 = vpop.f32.mrf.mxu0
        %v1390 = vadd.f32 0.0, %v1389
        %1391 = vmatmul.f32.gmra.mxu0 %v1295
        %v1392 = vpop.f32.mrf.mxu0
        %v1393 = vadd.f32 0.0, %v1392
        %1394 = vdwg.mxu0
        %v1395 = vadd.f32 %v1297, %v1355
        %v1396 = vadd.f32 %v1298, %v1384
        %v1397 = vadd.f32 %v1299, %v1358
        %v1398 = vadd.f32 %v1300, %v1387
        %v1399 = vadd.f32 %v1301, %v1361
        %v1400 = vadd.f32 %v1302, %v1390
        %v1401 = vadd.f32 %v1303, %v1364
        %v1402 = vadd.f32 %v1304, %v1393
        %1403 = vst [vmem:[#allocation2] sm:$0xff] %v1395
        %1404 = vst [vmem:[#allocation2 + $0x8] sm:$0xff] %v1396
        %1405 = vst [vmem:[#allocation2 + $0x10] sm:$0xff] %v1397
        %1406 = vst [vmem:[#allocation2 + $0x18] sm:$0xff] %v1398
        %1407 = vst [vmem:[#allocation2 + $0x20] sm:$0xff] %v1399
        %1408 = vst [vmem:[#allocation2 + $0x28] sm:$0xff] %v1400
        %1409 = vst [vmem:[#allocation2 + $0x30] sm:$0xff] %v1401
        %1410 = vst [vmem:[#allocation2 + $0x38] sm:$0xff] %v1402
        %p1411 = scmp.eq.s32.totalorder %s42, 1
        // Predicated region
        $region97: #{tpu_custom_call.1} parent=63 // pred_check
          %p1412 = pneg %p1411
        $region98: #{tpu_custom_call.1} parent=63 // pred_check_branch
          %1414 = sbr.rel (%p1412) target = $region100
        $region99: #{tpu_custom_call.1} parent=63 // pred_region
          %v1415 = vld [vmem:[#allocation2] sm:$0xff]
          %v1416 = vld [vmem:[#allocation2 + $0x8] sm:$0xff]
          %v1417 = vld [vmem:[#allocation2 + $0x10] sm:$0xff]
          %v1418 = vld [vmem:[#allocation2 + $0x18] sm:$0xff]
          %v1419 = vld [vmem:[#allocation2 + $0x20] sm:$0xff]
          %v1420 = vld [vmem:[#allocation2 + $0x28] sm:$0xff]
          %v1421 = vld [vmem:[#allocation2 + $0x30] sm:$0xff]
          %v1422 = vld [vmem:[#allocation2 + $0x38] sm:$0xff]
          %v1423 = vld [vmem:[%s10] sm:$0x3]
          %v1425 = vperm.slane %v1423, 0
          %v1426 = vperm.slane %v1423, 1
          %v1429 = vadd.f32 %v1415, %v1425
          %v1430 = vadd.f32 %v1416, %v1426
          %v1431 = vadd.f32 %v1417, %v1425
          %v1432 = vadd.f32 %v1418, %v1426
          %v1433 = vadd.f32 %v1419, %v1425
          %v1434 = vadd.f32 %v1420, %v1426
          %v1435 = vadd.f32 %v1421, %v1425
          %v1436 = vadd.f32 %v1422, %v1426
          %1437 = vst [vmem:[%s695] sm:$0xff] %v1429
          %1438 = vst [vmem:[%s695 + $0x8] sm:$0xff] %v1430
          %1439 = vst [vmem:[%s695 + $0x10] sm:$0xff] %v1431
          %1440 = vst [vmem:[%s695 + $0x18] sm:$0xff] %v1432
          %1441 = vst [vmem:[%s695 + $0x20] sm:$0xff] %v1433
          %1442 = vst [vmem:[%s695 + $0x28] sm:$0xff] %v1434
          %1443 = vst [vmem:[%s695 + $0x30] sm:$0xff] %v1435
          %1444 = vst [vmem:[%s695 + $0x38] sm:$0xff] %v1436
        $region100: #{tpu_custom_call.1} parent=63 // pred_fallthru
          _
        %s1445 = sand.u32 %s338, 1
        %s1446 = scalar_lea.sflag [#allocation5], %s1445
        %s1447 = sand.u32 %s338, 1
        %s1448 = smul.addr %s1447, 64
        %s1449 = scalar_lea.vmem [#allocation15], %s1448
        // Predicated region
        $region101: #{tpu_custom_call.1} parent=63 // pred_check
          %p1450 = pneg %p348
        $region102: #{tpu_custom_call.1} parent=63 // pred_check_branch
          %1452 = sbr.rel (%p1450) target = $region104
        $region103: #{tpu_custom_call.1} parent=63 // pred_region
          %s1453 = smul.u32 2, %s41
          %1455 = vsyncadd %s1446, 0
          %s1456 = smul.addr %s1453, 4
          %s1457 = smul.addr %s1456, 8
          %s1458 = scalar_lea.hbm %s11, %s1457
          %s1459 = sshll.u32 %s1449, 4
          %s1460 = int_to_ptr.vmem [resolvable:$true] %s1459
          %s1461 = sshll.u32 %s1458, 4
          %s1462 = int_to_ptr.hbm [resolvable:$true] %s1461
          %1467 = dma.vmem_to_hbm [thread:$0]  %s1460, 1024, %s1462, %s1446, 256, 256, 16
        $region104: #{tpu_custom_call.1} parent=63 // pred_fallthru
          _
      $region64: #{tpu_custom_call.1} parent=5 // pred_fallthru
        _
      %p1468 = scmp.le.s32.totalorder 2, %s32
      // Predicated region
      $region105: #{tpu_custom_call.1} parent=5 // pred_check
        %p1469 = pneg %p1468
      $region106: #{tpu_custom_call.1} parent=5 // pred_check_branch
        %1471 = sbr.rel (%p1469) target = $region108
      $region107: #{tpu_custom_call.1} parent=5 // pred_region
        %s1472 = ssub.s32 %s32, 2
        // Predicated region
        $region109: #{tpu_custom_call.1} parent=107 // pred_check
          %p1473 = pneg %p354
        $region110: #{tpu_custom_call.1} parent=107 // pred_check_branch
          %1475 = sbr.rel (%p1473) target = $region112
        $region111: #{tpu_custom_call.1} parent=107 // pred_region
          %s1476 = sand.u32 %s339, 1
          %s1477 = scalar_lea.sflag [#allocation5], %s1476
          %s1478 = sand.u32 %s339, 1
          %s1479 = smul.addr %s1478, 64
          %s1480 = scalar_lea.vmem [#allocation15], %s1479
          %1482 = dma.done %s1477, 1024
        $region112: #{tpu_custom_call.1} parent=107 // pred_fallthru
          _
      $region108: #{tpu_custom_call.1} parent=5 // pred_fallthru
        _
    $region6: #{tpu_custom_call.1} parent=1 // loop_footer
      %s36 = sadd.s32 1, %s32
    $region7: #{tpu_custom_call.1} parent=1 // loop_footer_branch
      %31 = sbr.rel target = $region3
    $region8: #{tpu_custom_call.1} parent=1 // loop_exit
      _
    %1483 = vsyncpa [#allocation4], 1
    %s1484 = scalar_lea.sflag [#allocation4], 1
    %1485 = vsyncpa %s1484, 1
    %1486 = vsyncpa [#allocation7], 1
    %s1487 = scalar_lea.sflag [#allocation7], 1
    %1488 = vsyncpa %s1487, 1
    %1489 = vsyncpa [#allocation10], 1
    %s1490 = scalar_lea.sflag [#allocation10], 1
    %1491 = vsyncpa %s1490, 1
    %1492 = vsyncpa [#allocation13], 1
    %s1493 = scalar_lea.sflag [#allocation13], 1
    %1494 = vsyncpa %s1493, 1
    %1495 = vsyncpa [#allocation5], 1
    %s1496 = scalar_lea.sflag [#allocation5], 1
    %1497 = vsyncpa %s1496, 1

</llo_original>
